<compile_context>
chip_gen: v7x
topology: tpu7x:2x2x1
jax: 0.10.0
libtpu: 0.0.40
codegen_flags: <defaults>
</compile_context>

<pallas_src>
import functools

import jax
import jax.numpy as jnp
from jax.experimental import pallas as pl
from jax.experimental.pallas import tpu as pltpu

_LANES = 128


def _conv_bn_prelu_kernel(x_ref, w_ref, p_ref, o_ref, *,
                          KH, KW, H_out, W_out, stride, dilation, bn_acti):
    """One grid step: nb images x one 128-wide Cout block."""
    nb, Hp, Wp, Cin = x_ref.shape
    Cb = o_ref.shape[-1]           # 128-wide Cout block
    sh, sw = stride
    dh, dw = dilation
    M = nb * H_out * W_out

    # Load once; widen to f32 for the slice/reshape/concat layout work (the
    # best-supported 32-bit relayout path), then feed the MXU bf16 operands.
    x = x_ref[...].astype(jnp.float32)                      # (nb, Hp, Wp, Cin)

    # Build the im2col LHS in registers: one (M, KH*KW*Cin) block.
    # TODO(synk): for stride > 1 layers, pre-stride via the index_map instead
    # of a strided in-kernel slice (avoids per-tap relayout work).
    taps = []
    for kh in range(KH):
        for kw in range(KW):
            h0 = kh * dh
            w0 = kw * dw
            patch = jax.lax.slice(
                x,
                (0, h0, w0, 0),
                (nb, h0 + (H_out - 1) * sh + 1, w0 + (W_out - 1) * sw + 1, Cin),
                (1, sh, sw, 1))                             # (nb, H_out, W_out, Cin)
            taps.append(patch.reshape(M, Cin))
    lhs = jnp.concatenate(taps, axis=-1).astype(jnp.bfloat16)   # (M, KH*KW*Cin)

    # Single big-K MXU matmul; f32 accumulation held in vregs (no VMEM scratch).
    y = jnp.dot(lhs, w_ref[...], preferred_element_type=jnp.float32)  # (M, Cb)

    # Folded eval-mode BN (scale/shift) + optional per-channel PReLU, in f32.
    p = p_ref[...]
    y = y * p[0:1, :] + p[1:2, :]
    if bn_acti:
        y = jnp.where(y >= 0.0, y, p[2:3, :] * y)

    # Lane-dense store: last dim is a full 128-lane block.
    o_ref[...] = y.reshape(nb, H_out, W_out, Cb).astype(o_ref.dtype)


def _pick_batch_block(N, H_out, W_out, Hp, Wp, Cin, KH, KW, budget_bytes):
    """Largest divisor of N so M>=256 (fills MXU rows) without busting VMEM."""
    def est(nb):
        M = nb * H_out * W_out
        x_bf16 = nb * Hp * Wp * Cin * 2 * 2        # double-buffered bf16 input block
        x_f32 = nb * Hp * Wp * Cin * 4             # widened in-kernel copy
        lhs = M * KH * KW * Cin * (4 + 2)          # f32 taps + bf16 im2col LHS
        w_blk = KH * KW * Cin * _LANES * 2 * 2     # double-buffered weight tile
        out_f32 = M * _LANES * 4 * (2 + 1)         # double-buffered out + live acc
        return x_bf16 + x_f32 + lhs + w_blk + out_f32

    nb = 1
    for cand in range(1, N + 1):
        if N % cand:
            continue
        if est(cand) > budget_bytes:
            break
        nb = cand
        if cand * H_out * W_out >= 256:
            break
    return nb, est(nb)


def conv_bn_prelu(x_nchw, weight_oihw, *, stride, padding, dilation,
                  scale=None, shift=None, alpha=None, bn_acti=True,
                  block_n=None):
    """Equivalent of Conv(nIn, nOut, kSize, stride, padding, dilation, groups=1,
    bn_acti, bias=False).forward with BatchNorm in eval mode (running stats
    folded into per-channel scale/shift)."""
    N, Cin, H, W = x_nchw.shape
    Cout, Cin_w, KH, KW = weight_oihw.shape
    assert Cin_w == Cin, "groups != 1 not supported"  # TODO(synk): grouped/depthwise conv
    sh, sw = stride
    ph, pw = padding
    dh, dw = dilation
    H_out = (H + 2 * ph - dh * (KH - 1) - 1) // sh + 1
    W_out = (W + 2 * pw - dw * (KW - 1) - 1) // sw + 1
    Hp, Wp = H + 2 * ph, W + 2 * pw

    Cout_pad = ((Cout + _LANES - 1) // _LANES) * _LANES

    if scale is None:
        scale = jnp.ones((Cout,), jnp.float32)
    if shift is None:
        shift = jnp.zeros((Cout,), jnp.float32)
    if alpha is None:
        alpha = jnp.zeros((Cout,), jnp.float32)

    # Batch block: keep M = nb * H_out * W_out >= 256 (fills the MXU rows)
    # while staying inside a conservative VMEM budget (v7x has only 64 MiB).
    budget = 28 * 2**20
    if block_n is None:
        nb, est_bytes = _pick_batch_block(N, H_out, W_out, Hp, Wp, Cin, KH, KW, budget)
    else:
        nb = block_n
        _, est_bytes = _pick_batch_block(nb, H_out, W_out, Hp, Wp, Cin, KH, KW, 1 << 62)
    assert N % nb == 0
    vmem_limit = int(min(max(2 * est_bytes, 32 * 2**20), 60 * 2**20))

    # Layout plumbing (glue): pad + NCHW -> NHWC, cast activations/weights to
    # bf16 for halved DMA bytes and native-rate MXU operands.
    # TODO(synk): keep the surrounding network in NHWC (or fold the transpose
    # into neighbouring ops) to drop these extra HBM passes entirely.
    x = jnp.pad(x_nchw, ((0, 0), (0, 0), (ph, ph), (pw, pw)))
    x = jnp.transpose(x, (0, 2, 3, 1)).astype(jnp.bfloat16)          # (N, Hp, Wp, Cin)

    w = jnp.transpose(weight_oihw, (2, 3, 1, 0)).reshape(KH * KW * Cin, Cout)
    w = jnp.pad(w, ((0, 0), (0, Cout_pad - Cout))).astype(jnp.bfloat16)

    pad_c = (0, Cout_pad - Cout)
    params = jnp.stack([
        jnp.pad(scale.astype(jnp.float32), pad_c),
        jnp.pad(shift.astype(jnp.float32), pad_c),
        jnp.pad(alpha.astype(jnp.float32), pad_c),
    ], axis=0)                                                        # (3, Cout_pad)

    kernel = functools.partial(
        _conv_bn_prelu_kernel, KH=KH, KW=KW, H_out=H_out, W_out=W_out,
        stride=(sh, sw), dilation=(dh, dw), bn_acti=bn_acti)

    flops = 2 * N * H_out * W_out * KH * KW * Cin * Cout_pad
    bytes_accessed = (x.size * 2 + w.size * 2 + params.size * 4
                      + N * H_out * W_out * Cout_pad * 4)
    cost = pl.CostEstimate(flops=flops, transcendentals=0,
                           bytes_accessed=bytes_accessed)

    # TODO(synk): for large H/W (full-res EMFFNet on v7x's 64 MiB VMEM), add an
    # H_out-tile grid axis (overlapping-row windows via manual DMA / pl.ANY).
    out_nhwc = pl.pallas_call(
        kernel,
        out_shape=jax.ShapeDtypeStruct((N, H_out, W_out, Cout_pad), jnp.float32),
        grid_spec=pltpu.PrefetchScalarGridSpec(
            num_scalar_prefetch=0,
            grid=(N // nb, Cout_pad // _LANES),
            in_specs=[
                pl.BlockSpec((nb, Hp, Wp, Cin), lambda n, c: (n, 0, 0, 0)),
                pl.BlockSpec((KH * KW * Cin, _LANES), lambda n, c: (0, c)),
                pl.BlockSpec((3, _LANES), lambda n, c: (0, c)),
            ],
            out_specs=pl.BlockSpec((nb, H_out, W_out, _LANES),
                                   lambda n, c: (n, 0, 0, c)),
        ),
        compiler_params=pltpu.CompilerParams(
            dimension_semantics=("parallel", "parallel"),
            vmem_limit_bytes=vmem_limit),
        cost_estimate=cost,
    )(x, w, params)

    out_nhwc = out_nhwc[..., :Cout]
    return jnp.transpose(out_nhwc, (0, 3, 1, 2))   # back to NCHW


def _reference(x_nchw, weight_oihw, stride, padding, dilation,
               scale, shift, alpha, bn_acti):
    # Matches the kernel's intended numerics: bf16 operands, f32 accumulation.
    xb = x_nchw.astype(jnp.bfloat16).astype(jnp.float32)
    wb = weight_oihw.astype(jnp.bfloat16).astype(jnp.float32)
    y = jax.lax.conv_general_dilated(
        xb, wb, window_strides=stride, padding=[padding, padding],
        rhs_dilation=dilation,
        dimension_numbers=("NCHW", "OIHW", "NCHW"),
        precision=jax.lax.Precision.HIGHEST)
    y = y * scale[None, :, None, None] + shift[None, :, None, None]
    if bn_acti:
        y = jnp.where(y >= 0.0, y, alpha[None, :, None, None] * y)
    return y


if __name__ == "__main__":
    # Conv(nIn=4, nOut=8, kSize=3, stride=1, padding=1, dilation=(1,1),
    #      groups=1, bn_acti=True, bias=False)
    N, Cin, H, W = 2, 4, 16, 16
    Cout, K = 8, 3
    stride, padding, dilation = (1, 1), (1, 1), (1, 1)
    eps = 1e-3

    key = jax.random.PRNGKey(0)
    k_x, k_w, k_g, k_b, k_m, k_v = jax.random.split(key, 6)

    x = jax.random.normal(k_x, (N, Cin, H, W), dtype=jnp.float32)
    weight = jax.random.normal(k_w, (Cout, Cin, K, K), dtype=jnp.float32) * 0.1

    # Deterministic BatchNorm2d (eval-mode running stats) + PReLU parameters.
    gamma = 1.0 + 0.1 * jax.random.normal(k_g, (Cout,), dtype=jnp.float32)
    beta = 0.1 * jax.random.normal(k_b, (Cout,), dtype=jnp.float32)
    running_mean = 0.1 * jax.random.normal(k_m, (Cout,), dtype=jnp.float32)
    running_var = 1.0 + 0.1 * jax.random.uniform(k_v, (Cout,), dtype=jnp.float32)
    alpha = jnp.full((Cout,), 0.25, dtype=jnp.float32)  # PReLU default init

    # Fold eval-mode BN into per-channel scale/shift (bias=False).
    scale = gamma / jnp.sqrt(running_var + eps)
    shift = beta - running_mean * scale

    # --- Conv with bn_acti=True (Conv2d -> BN(eval) -> PReLU) ---
    out = conv_bn_prelu(x, weight, stride=stride, padding=padding,
                        dilation=dilation, scale=scale, shift=shift,
                        alpha=alpha, bn_acti=True)
    out = jax.block_until_ready(out)

    ref = _reference(x, weight, stride, padding, dilation,
                     scale, shift, alpha, bn_acti=True)
    assert out.shape == (N, Cout, H, W)
    assert jnp.allclose(out, ref, atol=1e-3, rtol=1e-3), \
        float(jnp.max(jnp.abs(out - ref)))

    # --- Conv with bn_acti=False (plain Conv2d, bias=False) ---
    out2 = conv_bn_prelu(x, weight, stride=stride, padding=padding,
                         dilation=dilation, bn_acti=False)
    out2 = jax.block_until_ready(out2)
    ref2 = _reference(x, weight, stride, padding, dilation,
                      jnp.ones((Cout,), jnp.float32),
                      jnp.zeros((Cout,), jnp.float32),
                      jnp.zeros((Cout,), jnp.float32), bn_acti=False)
    assert out2.shape == (N, Cout, H, W)
    assert jnp.allclose(out2, ref2, atol=1e-3, rtol=1e-3), \
        float(jnp.max(jnp.abs(out2 - ref2)))

    print("KERNEL_OK")
</pallas_src>

<mosaic_0001>
module attributes {stable_mosaic.version = 11 : i64} {
  func.func @_conv_bn_prelu_kernel(%arg0: i32, %arg1: i32, %arg2: memref<1x18x18x4xbf16, #tpu.memory_space<vmem>>, %arg3: memref<36x128xbf16, #tpu.memory_space<vmem>>, %arg4: memref<3x128xf32, #tpu.memory_space<vmem>>, %arg5: memref<1x16x16x128xf32, #tpu.memory_space<vmem>>) attributes {dimension_semantics = [#tpu.dimension_semantics<parallel>, #tpu.dimension_semantics<parallel>], iteration_bounds = array<i64: 2, 1>, scalar_prefetch = 0 : i64, scratch_operands = 0 : i64, tpu.core_type = #tpu.core_type<tc>, window_params = [{transform_indices = @transform_0, window_bounds = array<i64: 1, 18, 18, 4>}, {transform_indices = @transform_1, window_bounds = array<i64: 36, 128>}, {transform_indices = @transform_2, window_bounds = array<i64: 3, 128>}, {transform_indices = @transform_3, window_bounds = array<i64: 1, 16, 16, 128>}]} {
    %c0 = arith.constant 0 : index
    %c0_0 = arith.constant 0 : index
    %c0_1 = arith.constant 0 : index
    %c0_2 = arith.constant 0 : index
    %0 = vector.load %arg2[%c0, %c0_0, %c0_1, %c0_2] : memref<1x18x18x4xbf16, #tpu.memory_space<vmem>>, vector<1x18x18x4xbf16>
    %1 = arith.extf %0 : vector<1x18x18x4xbf16> to vector<1x18x18x4xf32>
    %2 = vector.extract_strided_slice %1 {offsets = [0, 0, 0, 0], sizes = [1, 16, 16, 4], strides = [1, 1, 1, 1]} : vector<1x18x18x4xf32> to vector<1x16x16x4xf32>
    %3 = vector.shape_cast %2 : vector<1x16x16x4xf32> to vector<256x4xf32>
    %4 = vector.extract_strided_slice %1 {offsets = [0, 0, 1, 0], sizes = [1, 16, 16, 4], strides = [1, 1, 1, 1]} : vector<1x18x18x4xf32> to vector<1x16x16x4xf32>
    %5 = vector.shape_cast %4 : vector<1x16x16x4xf32> to vector<256x4xf32>
    %6 = vector.extract_strided_slice %1 {offsets = [0, 0, 2, 0], sizes = [1, 16, 16, 4], strides = [1, 1, 1, 1]} : vector<1x18x18x4xf32> to vector<1x16x16x4xf32>
    %7 = vector.shape_cast %6 : vector<1x16x16x4xf32> to vector<256x4xf32>
    %8 = vector.extract_strided_slice %1 {offsets = [0, 1, 0, 0], sizes = [1, 16, 16, 4], strides = [1, 1, 1, 1]} : vector<1x18x18x4xf32> to vector<1x16x16x4xf32>
    %9 = vector.shape_cast %8 : vector<1x16x16x4xf32> to vector<256x4xf32>
    %10 = vector.extract_strided_slice %1 {offsets = [0, 1, 1, 0], sizes = [1, 16, 16, 4], strides = [1, 1, 1, 1]} : vector<1x18x18x4xf32> to vector<1x16x16x4xf32>
    %11 = vector.shape_cast %10 : vector<1x16x16x4xf32> to vector<256x4xf32>
    %12 = vector.extract_strided_slice %1 {offsets = [0, 1, 2, 0], sizes = [1, 16, 16, 4], strides = [1, 1, 1, 1]} : vector<1x18x18x4xf32> to vector<1x16x16x4xf32>
    %13 = vector.shape_cast %12 : vector<1x16x16x4xf32> to vector<256x4xf32>
    %14 = vector.extract_strided_slice %1 {offsets = [0, 2, 0, 0], sizes = [1, 16, 16, 4], strides = [1, 1, 1, 1]} : vector<1x18x18x4xf32> to vector<1x16x16x4xf32>
    %15 = vector.shape_cast %14 : vector<1x16x16x4xf32> to vector<256x4xf32>
    %16 = vector.extract_strided_slice %1 {offsets = [0, 2, 1, 0], sizes = [1, 16, 16, 4], strides = [1, 1, 1, 1]} : vector<1x18x18x4xf32> to vector<1x16x16x4xf32>
    %17 = vector.shape_cast %16 : vector<1x16x16x4xf32> to vector<256x4xf32>
    %18 = vector.extract_strided_slice %1 {offsets = [0, 2, 2, 0], sizes = [1, 16, 16, 4], strides = [1, 1, 1, 1]} : vector<1x18x18x4xf32> to vector<1x16x16x4xf32>
    %19 = vector.shape_cast %18 : vector<1x16x16x4xf32> to vector<256x4xf32>
    %20 = tpu.concatenate %3, %5, %7, %9, %11, %13, %15, %17, %19 in 1 : vector<256x4xf32>, vector<256x4xf32>, vector<256x4xf32>, vector<256x4xf32>, vector<256x4xf32>, vector<256x4xf32>, vector<256x4xf32>, vector<256x4xf32>, vector<256x4xf32> -> vector<256x36xf32>
    %21 = arith.truncf %20 : vector<256x36xf32> to vector<256x36xbf16>
    %c0_3 = arith.constant 0 : index
    %c0_4 = arith.constant 0 : index
    %22 = vector.load %arg3[%c0_3, %c0_4] : memref<36x128xbf16, #tpu.memory_space<vmem>>, vector<36x128xbf16>
    %cst = arith.constant dense<0.000000e+00> : vector<256x128xf32>
    %23 = tpu.matmul %21, %22, %cst {dimension_numbers = #tpu.dot_dimension_numbers<[1], [0], [0], [1], [0, 0, 1, 1], [], []>} : vector<256x36xbf16>, vector<36x128xbf16>, vector<256x128xf32> -> vector<256x128xf32>
    %c0_5 = arith.constant 0 : index
    %c0_6 = arith.constant 0 : index
    %24 = vector.load %arg4[%c0_5, %c0_6] : memref<3x128xf32, #tpu.memory_space<vmem>>, vector<3x128xf32>
    %25 = vector.extract_strided_slice %24 {offsets = [0, 0], sizes = [1, 128], strides = [1, 1]} : vector<3x128xf32> to vector<1x128xf32>
    %26 = vector.broadcast %25 : vector<1x128xf32> to vector<256x128xf32>
    %27 = arith.mulf %23, %26 : vector<256x128xf32>
    %28 = vector.extract_strided_slice %24 {offsets = [1, 0], sizes = [1, 128], strides = [1, 1]} : vector<3x128xf32> to vector<1x128xf32>
    %29 = vector.broadcast %28 : vector<1x128xf32> to vector<256x128xf32>
    %30 = arith.addf %27, %29 : vector<256x128xf32>
    %cst_7 = arith.constant 0.000000e+00 : f32
    %31 = vector.broadcast %cst_7 : f32 to vector<256x128xf32>
    %32 = arith.cmpf oge, %30, %31 : vector<256x128xf32>
    %33 = vector.extract_strided_slice %24 {offsets = [2, 0], sizes = [1, 128], strides = [1, 1]} : vector<3x128xf32> to vector<1x128xf32>
    %34 = vector.broadcast %33 : vector<1x128xf32> to vector<256x128xf32>
    %35 = arith.mulf %34, %30 : vector<256x128xf32>
    %36 = arith.select %32, %30, %35 : vector<256x128xi1>, vector<256x128xf32>
    %37 = vector.shape_cast %36 : vector<256x128xf32> to vector<1x16x16x128xf32>
    %c0_8 = arith.constant 0 : index
    %c0_9 = arith.constant 0 : index
    %c0_10 = arith.constant 0 : index
    %c0_11 = arith.constant 0 : index
    %38 = vector.load %arg5[%c0_8, %c0_9, %c0_10, %c0_11] : memref<1x16x16x128xf32, #tpu.memory_space<vmem>>, vector<1x16x16x128xf32>
    tpu.vector_store %arg5[%c0_8, %c0_9, %c0_10, %c0_11], %37 {strides = array<i32>} : memref<1x16x16x128xf32, #tpu.memory_space<vmem>>, vector<1x16x16x128xf32>,
    return
  }
  func.func @transform_0(%arg0: i32, %arg1: i32) -> (i32, i32, i32, i32) {
    %c0_i32 = arith.constant 0 : i32
    %c0_i32_0 = arith.constant 0 : i32
    %c0_i32_1 = arith.constant 0 : i32
    %c0_i32_2 = arith.constant 0 : i32
    return %arg0, %c0_i32, %c0_i32_0, %c0_i32_1 : i32, i32, i32, i32
  }
  func.func @transform_1(%arg0: i32, %arg1: i32) -> (i32, i32) {
    %c0_i32 = arith.constant 0 : i32
    %c0_i32_0 = arith.constant 0 : i32
    return %c0_i32, %arg1 : i32, i32
  }
  func.func @transform_2(%arg0: i32, %arg1: i32) -> (i32, i32) {
    %c0_i32 = arith.constant 0 : i32
    %c0_i32_0 = arith.constant 0 : i32
    return %c0_i32, %arg1 : i32, i32
  }
  func.func @transform_3(%arg0: i32, %arg1: i32) -> (i32, i32, i32, i32) {
    %c0_i32 = arith.constant 0 : i32
    %c0_i32_0 = arith.constant 0 : i32
    %c0_i32_1 = arith.constant 0 : i32
    return %arg0, %c0_i32, %c0_i32_0, %arg1 : i32, i32, i32, i32
  }
}

</mosaic_0001>

<llo_original>
// kernel: tpu_custom_call.1
$region0: #{tpu_custom_call.1}
  #allocation0 [shape = 'u32[]', space=smem, size = 0x4, offset = 0x4, fixed_abs, tag = 'smem constant byte address 0x4 - core index']
  #allocation1 [shape = 'u32[144,128]{1,0:T(1,128)}', space=vmem, size = 0x12000, scoped, tag = 'internal scratch']
  %s0 = inlined_call_operand.vmem [shape: bf16[2,18,18,4], index: 0, kind: input, shape index: {}]
  %s1 = inlined_call_operand.vmem [shape: bf16[36,128], index: 1, kind: input, shape index: {}]
  %s2 = inlined_call_operand.vmem [shape: f32[3,128], index: 2, kind: input, shape index: {}]
  %s3 = inlined_call_operand.hbm [shape: f32[2,16,16,128], index: 3, kind: output, shape index: {}]
  %s4 = sld [smem:[#allocation0]]
  $region45: #{tpu_custom_call.1} parent=0
    _
  %s6 = ssub.s32 1, %s4
  %s7 = scalar_select 0, %s6, %s4
  $region1: #{tpu_custom_call.1} parent=0
    #allocation2 [shape = 'u8[262144]{0}', space=vmem, size = 0x40000, scoped, tag = 'output window, operand 0']
    #allocation3 [shape = 's32[2]{0}', space=sflag, size = 0x8, scoped, tag = 'scoped memory for tpu_custom_call.1']
    %8 = vsyncpa [#allocation3], 0
    %s9 = scalar_lea.sflag [#allocation3], 1
    %10 = vsyncpa %s9, 0
    loop: start=0, step=1, limit=4
    $region2: #{tpu_custom_call.1} parent=1 // loop_pre_header
      _
    $region3: #{tpu_custom_call.1} parent=1 // loop_header
      %s12 = sphi 0, %s16
      %p13 = scmp.ge.s32.totalorder %s12, 4
      %s19 = sphi 0, %s31
      %s20 = sphi 0, %s27
      %s21 = sphi 0, %s19
      %s22 = sphi 0, %s20
      %s23 = sphi 0, %s21
      %s24 = sphi 0, %s22
      %s34 = sphi 0, %s36
      %s37 = sphi 0, %s34
      %s38 = sphi 0, %s37
      %s54 = sphi 0, %s38
      %s60 = sphi 0, %s62
      %s63 = sphi 0, %s60
      %s64 = sphi 0, %s63
      %s80 = sphi 0, %s64
      %s86 = sphi 0, %s88
      %s89 = sphi 0, %s86
      %s90 = sphi 0, %s89
      %s106 = sphi 0, %s90
      %s114 = sphi 0, %s116
      %s117 = sphi 0, %s114
      %s118 = sphi 0, %s117
      %s134 = sphi 0, %s118
    $region4: #{tpu_custom_call.1} parent=1 // loop_header_branch
      %15 = sbr.rel (%p13) target = $region8
    $region5: #{tpu_custom_call.1} parent=1 // loop_body
      %s17 = ssub.s32 %s12, 1
      %s18 = ssub.s32 %s12, 2
      %s25 = sadd.s32 1, %s20
      %p26 = scmp.ge.s32.totalorder %s25, 1
      %s27 = scalar_select %p26, 0, %s25
      %s28 = sadd.s32 1, %s19
      %s29 = scalar_select %p26, %s28, %s19
      %p30 = scmp.ge.s32.totalorder %s29, 2
      %s31 = scalar_select %p30, 0, %s29
      %s32 = ssub.s32 %s19, %s31
      %p33 = scmp.eq.s32.totalorder %s32, 0
      %s35 = sadd.s32 %s34, 1
      %s36 = scalar_select %p33, %s34, %s35
      %p39 = pneg %p33
      %p40 = scmp.eq.s32.totalorder %s12, 1
      %p41 = por %p39, %p40
      %p42 = scmp.ne.s32.totalorder %s34, %s37
      %p43 = scmp.eq.s32.totalorder %s12, 0
      %p44 = por %p42, %p43
      %p45 = scmp.ne.s32.totalorder %s34, %s37
      %p46 = scmp.eq.s32.totalorder %s17, 1
      %p47 = por %p45, %p46
      %p48 = scmp.ne.s32.totalorder %s37, %s38
      %p49 = scmp.eq.s32.totalorder %s17, 0
      %p50 = por %p48, %p49
      %p51 = scmp.ne.s32.totalorder %s37, %s38
      %p52 = scmp.eq.s32.totalorder %s18, 1
      %p53 = por %p51, %p52
      %p55 = scmp.ne.s32.totalorder %s38, %s54
      %p56 = scmp.eq.s32.totalorder %s18, 0
      %p57 = por %p55, %p56
      %s58 = ssub.s32 %s20, %s27
      %p59 = scmp.eq.s32.totalorder %s58, 0
      %s61 = sadd.s32 %s60, 1
      %s62 = scalar_select %p59, %s60, %s61
      %p65 = pneg %p59
      %p66 = scmp.eq.s32.totalorder %s12, 1
      %p67 = por %p65, %p66
      %p68 = scmp.ne.s32.totalorder %s60, %s63
      %p69 = scmp.eq.s32.totalorder %s12, 0
      %p70 = por %p68, %p69
      %p71 = scmp.ne.s32.totalorder %s60, %s63
      %p72 = scmp.eq.s32.totalorder %s17, 1
      %p73 = por %p71, %p72
      %p74 = scmp.ne.s32.totalorder %s63, %s64
      %p75 = scmp.eq.s32.totalorder %s17, 0
      %p76 = por %p74, %p75
      %p77 = scmp.ne.s32.totalorder %s63, %s64
      %p78 = scmp.eq.s32.totalorder %s18, 1
      %p79 = por %p77, %p78
      %p81 = scmp.ne.s32.totalorder %s64, %s80
      %p82 = scmp.eq.s32.totalorder %s18, 0
      %p83 = por %p81, %p82
      %s84 = ssub.s32 %s20, %s27
      %p85 = scmp.eq.s32.totalorder %s84, 0
      %s87 = sadd.s32 %s86, 1
      %s88 = scalar_select %p85, %s86, %s87
      %p91 = pneg %p85
      %p92 = scmp.eq.s32.totalorder %s12, 1
      %p93 = por %p91, %p92
      %p94 = scmp.ne.s32.totalorder %s86, %s89
      %p95 = scmp.eq.s32.totalorder %s12, 0
      %p96 = por %p94, %p95
      %p97 = scmp.ne.s32.totalorder %s86, %s89
      %p98 = scmp.eq.s32.totalorder %s17, 1
      %p99 = por %p97, %p98
      %p100 = scmp.ne.s32.totalorder %s89, %s90
      %p101 = scmp.eq.s32.totalorder %s17, 0
      %p102 = por %p100, %p101
      %p103 = scmp.ne.s32.totalorder %s89, %s90
      %p104 = scmp.eq.s32.totalorder %s18, 1
      %p105 = por %p103, %p104
      %p107 = scmp.ne.s32.totalorder %s90, %s106
      %p108 = scmp.eq.s32.totalorder %s18, 0
      %p109 = por %p107, %p108
      %s110 = ssub.s32 %s19, %s31
      %s111 = ssub.s32 %s20, %s27
      %s112 = sor.u32 %s110, %s111
      %p113 = scmp.eq.s32.totalorder %s112, 0
      %s115 = sadd.s32 %s114, 1
      %s116 = scalar_select %p113, %s114, %s115
      %p119 = pneg %p113
      %p120 = scmp.eq.s32.totalorder %s12, 1
      %p121 = por %p119, %p120
      %p122 = scmp.ne.s32.totalorder %s114, %s117
      %p123 = scmp.eq.s32.totalorder %s12, 0
      %p124 = por %p122, %p123
      %p125 = scmp.ne.s32.totalorder %s114, %s117
      %p126 = scmp.eq.s32.totalorder %s17, 1
      %p127 = por %p125, %p126
      %p128 = scmp.ne.s32.totalorder %s117, %s118
      %p129 = scmp.eq.s32.totalorder %s17, 0
      %p130 = por %p128, %p129
      %p131 = scmp.ne.s32.totalorder %s117, %s118
      %p132 = scmp.eq.s32.totalorder %s18, 1
      %p133 = por %p131, %p132
      %p135 = scmp.ne.s32.totalorder %s118, %s134
      %p136 = scmp.eq.s32.totalorder %s18, 0
      %p137 = por %p135, %p136
      %p138 = scmp.le.s32.totalorder 1, %s12
      %p139 = scmp.lt.s32.totalorder %s12, 3
      %p140 = pnand %p138, %p139
      %p141 = pneg %p140
      // Predicated region
      $region9: #{tpu_custom_call.1} parent=5 // pred_check
        _
      $region10: #{tpu_custom_call.1} parent=5 // pred_check_branch
        %143 = sbr.rel (%p140) target = $region12
      $region11: #{tpu_custom_call.1} parent=5 // pred_region
        %s144 = ssub.s32 %s12, 1
        // Predicated region
        $region13: #{tpu_custom_call.1} parent=11 // pred_check
          %p145 = pneg %p76
        $region14: #{tpu_custom_call.1} parent=11 // pred_check_branch
          %147 = sbr.rel (%p145) target = $region16
        $region15: #{tpu_custom_call.1} parent=11 // pred_region
          %p148 = scmp.lt.s32.totalorder %s22, 0
          %s149 = scalar_select %p148, %s22, 0
          %s150 = smul.addr %s149, 4
          %s151 = scalar_lea.vmem %s1, %s150
        $region16: #{tpu_custom_call.1} parent=11 // pred_fallthru
          _
        // Predicated region
        $region17: #{tpu_custom_call.1} parent=11 // pred_check
          %p152 = pneg %p102
        $region18: #{tpu_custom_call.1} parent=11 // pred_check_branch
          %154 = sbr.rel (%p152) target = $region20
        $region19: #{tpu_custom_call.1} parent=11 // pred_region
          %p155 = scmp.lt.s32.totalorder %s22, 0
          %s156 = scalar_select %p155, %s22, 0
          %s157 = smul.addr %s156, 4
          %s158 = scalar_lea.vmem %s2, %s157
        $region20: #{tpu_custom_call.1} parent=11 // pred_fallthru
          _
      $region12: #{tpu_custom_call.1} parent=5 // pred_fallthru
        _
      %p159 = scmp.lt.s32.totalorder %s12, 2
      // Predicated region
      $region21: #{tpu_custom_call.1} parent=5 // pred_check
        %p160 = pneg %p159
      $region22: #{tpu_custom_call.1} parent=5 // pred_check_branch
        %162 = sbr.rel (%p160) target = $region24
      $region23: #{tpu_custom_call.1} parent=5 // pred_region
        // Predicated region
        $region25: #{tpu_custom_call.1} parent=23 // pred_check
          %p163 = pneg %p44
        $region26: #{tpu_custom_call.1} parent=23 // pred_check_branch
          %165 = sbr.rel (%p163) target = $region28
        $region27: #{tpu_custom_call.1} parent=23 // pred_region
          %p166 = scmp.lt.s32.totalorder %s19, 1
          %s167 = scalar_select %p166, %s19, 1
          %s168 = smul.addr %s167, 54
          %s169 = smul.addr %s168, 4
          %s170 = scalar_lea.vmem %s0, %s169
        $region28: #{tpu_custom_call.1} parent=23 // pred_fallthru
          _
      $region24: #{tpu_custom_call.1} parent=5 // pred_fallthru
        _
      %p171 = scmp.le.s32.totalorder 1, %s12
      %p172 = scmp.lt.s32.totalorder %s12, 3
      %p173 = pnand %p171, %p172
      %p174 = pneg %p173
      // Predicated region
      $region29: #{tpu_custom_call.1} parent=5 // pred_check
        _
      $region30: #{tpu_custom_call.1} parent=5 // pred_check_branch
        %176 = sbr.rel (%p173) target = $region32
      $region31: #{tpu_custom_call.1} parent=5 // pred_region
        %s177 = ssub.s32 %s12, 1
        %p178 = scmp.lt.s32.totalorder %s21, 1
        %s179 = scalar_select %p178, %s21, 1
        %s180 = smul.addr %s179, 54
        %s181 = smul.addr %s180, 4
        %s182 = scalar_lea.vmem %s0, %s181
        %p183 = pneg %p50
        %p184 = pneg %p47
        %p185 = scmp.lt.s32.totalorder %s22, 0
        %s186 = scalar_select %p185, %s22, 0
        %s187 = smul.addr %s186, 4
        %s188 = scalar_lea.vmem %s1, %s187
        %p189 = pneg %p76
        %p190 = pneg %p73
        %p191 = scmp.lt.s32.totalorder %s22, 0
        %s192 = scalar_select %p191, %s22, 0
        %s193 = smul.addr %s192, 4
        %s194 = scalar_lea.vmem %s2, %s193
        %p195 = pneg %p102
        %p196 = pneg %p99
        %p197 = pneg %p130
        %p198 = pneg %p127
        %s199 = sand.u32 %s117, 1
        %s200 = scalar_lea.sflag [#allocation3], %s199
        %s201 = sand.u32 %s117, 1
        %s202 = smul.addr %s201, 256
        %s203 = scalar_lea.vmem [#allocation2], %s202
        %p204 = scmp.lt.s32.totalorder %s21, 1
        %s205 = scalar_select %p204, %s21, 1
        %s206 = smul.addr %s205, 54
        %s207 = smul.addr %s206, 4
        %s208 = scalar_lea.vmem %s0, %s207
        %p209 = scmp.lt.s32.totalorder %s22, 0
        %s210 = scalar_select %p209, %s22, 0
        %s211 = smul.addr %s210, 4
        %s212 = scalar_lea.vmem %s1, %s211
        %p213 = scmp.lt.s32.totalorder %s22, 0
        %s214 = scalar_select %p213, %s22, 0
        %s215 = smul.addr %s214, 4
        %s216 = scalar_lea.vmem %s2, %s215
        %v218 = vld [vmem:[%s208] sm:$0xf]
        %v219 = vld [vmem:[%s208 + $0x4] sm:$0xf]
        %v220 = vld [vmem:[%s208 + $0x8] sm:$0x1]
        %v221 = vld [vmem:[%s208 + $0xc] sm:$0xf]
        %v222 = vld [vmem:[%s208 + $0x10] sm:$0xf]
        %v223 = vld [vmem:[%s208 + $0x14] sm:$0x1]
        %v224 = vld [vmem:[%s208 + $0x18] sm:$0xf]
        %v225 = vld [vmem:[%s208 + $0x1c] sm:$0xf]
        %v226 = vld [vmem:[%s208 + $0x20] sm:$0x1]
        %v227 = vld [vmem:[%s208 + $0x24] sm:$0xf]
        %v228 = vld [vmem:[%s208 + $0x28] sm:$0xf]
        %v229 = vld [vmem:[%s208 + $0x2c] sm:$0x1]
        %v230 = vld [vmem:[%s208 + $0x30] sm:$0xf]
        %v231 = vld [vmem:[%s208 + $0x34] sm:$0xf]
        %v232 = vld [vmem:[%s208 + $0x38] sm:$0x1]
        %v233 = vld [vmem:[%s208 + $0x3c] sm:$0xf]
        %v234 = vld [vmem:[%s208 + $0x40] sm:$0xf]
        %v235 = vld [vmem:[%s208 + $0x44] sm:$0x1]
        %v236 = vld [vmem:[%s208 + $0x48] sm:$0xf]
        %v237 = vld [vmem:[%s208 + $0x4c] sm:$0xf]
        %v238 = vld [vmem:[%s208 + $0x50] sm:$0x1]
        %v239 = vld [vmem:[%s208 + $0x54] sm:$0xf]
        %v240 = vld [vmem:[%s208 + $0x58] sm:$0xf]
        %v241 = vld [vmem:[%s208 + $0x5c] sm:$0x1]
        %v242 = vld [vmem:[%s208 + $0x60] sm:$0xf]
        %v243 = vld [vmem:[%s208 + $0x64] sm:$0xf]
        %v244 = vld [vmem:[%s208 + $0x68] sm:$0x1]
        %v245 = vld [vmem:[%s208 + $0x6c] sm:$0xf]
        %v246 = vld [vmem:[%s208 + $0x70] sm:$0xf]
        %v247 = vld [vmem:[%s208 + $0x74] sm:$0x1]
        %v248 = vld [vmem:[%s208 + $0x78] sm:$0xf]
        %v249 = vld [vmem:[%s208 + $0x7c] sm:$0xf]
        %v250 = vld [vmem:[%s208 + $0x80] sm:$0x1]
        %v251 = vld [vmem:[%s208 + $0x84] sm:$0xf]
        %v252 = vld [vmem:[%s208 + $0x88] sm:$0xf]
        %v253 = vld [vmem:[%s208 + $0x8c] sm:$0x1]
        %v254 = vld [vmem:[%s208 + $0x90] sm:$0xf]
        %v255 = vld [vmem:[%s208 + $0x94] sm:$0xf]
        %v256 = vld [vmem:[%s208 + $0x98] sm:$0x1]
        %v257 = vld [vmem:[%s208 + $0x9c] sm:$0xf]
        %v258 = vld [vmem:[%s208 + $0xa0] sm:$0xf]
        %v259 = vld [vmem:[%s208 + $0xa4] sm:$0x1]
        %v260 = vld [vmem:[%s208 + $0xa8] sm:$0xf]
        %v261 = vld [vmem:[%s208 + $0xac] sm:$0xf]
        %v262 = vld [vmem:[%s208 + $0xb0] sm:$0x1]
        %v263 = vld [vmem:[%s208 + $0xb4] sm:$0xf]
        %v264 = vld [vmem:[%s208 + $0xb8] sm:$0xf]
        %v265 = vld [vmem:[%s208 + $0xbc] sm:$0x1]
        %v266 = vld [vmem:[%s208 + $0xc0] sm:$0xf]
        %v267 = vld [vmem:[%s208 + $0xc4] sm:$0xf]
        %v268 = vld [vmem:[%s208 + $0xc8] sm:$0x1]
        %v269 = vld [vmem:[%s208 + $0xcc] sm:$0xf]
        %v270 = vld [vmem:[%s208 + $0xd0] sm:$0xf]
        %v271 = vld [vmem:[%s208 + $0xd4] sm:$0x1]
        %v272 = vunpack.c.l.bf16 %v218
        %v273 = vunpack.c.l.bf16 %v219
        %v274 = vunpack.c.l.bf16 %v220
        %v275 = vunpack.c.l.bf16 %v221
        %v276 = vunpack.c.l.bf16 %v222
        %v277 = vunpack.c.l.bf16 %v223
        %v278 = vunpack.c.l.bf16 %v224
        %v279 = vunpack.c.l.bf16 %v225
        %v280 = vunpack.c.l.bf16 %v226
        %v281 = vunpack.c.l.bf16 %v227
        %v282 = vunpack.c.l.bf16 %v228
        %v283 = vunpack.c.l.bf16 %v229
        %v284 = vunpack.c.l.bf16 %v230
        %v285 = vunpack.c.l.bf16 %v231
        %v286 = vunpack.c.l.bf16 %v232
        %v287 = vunpack.c.l.bf16 %v233
        %v288 = vunpack.c.l.bf16 %v234
        %v289 = vunpack.c.l.bf16 %v235
        %v290 = vunpack.c.l.bf16 %v236
        %v291 = vunpack.c.l.bf16 %v237
        %v292 = vunpack.c.l.bf16 %v238
        %v293 = vunpack.c.l.bf16 %v239
        %v294 = vunpack.c.l.bf16 %v240
        %v295 = vunpack.c.l.bf16 %v241
        %v296 = vunpack.c.l.bf16 %v242
        %v297 = vunpack.c.l.bf16 %v243
        %v298 = vunpack.c.l.bf16 %v244
        %v299 = vunpack.c.l.bf16 %v245
        %v300 = vunpack.c.l.bf16 %v246
        %v301 = vunpack.c.l.bf16 %v247
        %v302 = vunpack.c.l.bf16 %v248
        %v303 = vunpack.c.l.bf16 %v249
        %v304 = vunpack.c.l.bf16 %v250
        %v305 = vunpack.c.l.bf16 %v251
        %v306 = vunpack.c.l.bf16 %v252
        %v307 = vunpack.c.l.bf16 %v253
        %v308 = vunpack.c.l.bf16 %v254
        %v309 = vunpack.c.l.bf16 %v255
        %v310 = vunpack.c.l.bf16 %v256
        %v311 = vunpack.c.l.bf16 %v257
        %v312 = vunpack.c.l.bf16 %v258
        %v313 = vunpack.c.l.bf16 %v259
        %v314 = vunpack.c.l.bf16 %v260
        %v315 = vunpack.c.l.bf16 %v261
        %v316 = vunpack.c.l.bf16 %v262
        %v317 = vunpack.c.l.bf16 %v263
        %v318 = vunpack.c.l.bf16 %v264
        %v319 = vunpack.c.l.bf16 %v265
        %v320 = vunpack.c.l.bf16 %v266
        %v321 = vunpack.c.l.bf16 %v267
        %v322 = vunpack.c.l.bf16 %v268
        %v323 = vunpack.c.l.bf16 %v269
        %v324 = vunpack.c.l.bf16 %v270
        %v325 = vunpack.c.l.bf16 %v271
        %vm374 = vcmask 1046528
        %v375 = vrot.slane %v272, 1
        %v376 = vrot.slane %v273, 1
        %v377 = vsel %vm374, %v375, %v376
        %v378 = vrot.slane %v274, 1
        %v379 = vsel %vm374, %v376, %v378
        %v380 = vrot.slane %v275, 1
        %v381 = vrot.slane %v276, 1
        %v382 = vsel %vm374, %v380, %v381
        %v383 = vrot.slane %v277, 1
        %v384 = vsel %vm374, %v381, %v383
        %v385 = vrot.slane %v278, 1
        %v386 = vrot.slane %v279, 1
        %v387 = vsel %vm374, %v385, %v386
        %v388 = vrot.slane %v280, 1
        %v389 = vsel %vm374, %v386, %v388
        %v390 = vrot.slane %v281, 1
        %v391 = vrot.slane %v282, 1
        %v392 = vsel %vm374, %v390, %v391
        %v393 = vrot.slane %v283, 1
        %v394 = vsel %vm374, %v391, %v393
        %v395 = vrot.slane %v284, 1
        %v396 = vrot.slane %v285, 1
        %v397 = vsel %vm374, %v395, %v396
        %v398 = vrot.slane %v286, 1
        %v399 = vsel %vm374, %v396, %v398
        %v400 = vrot.slane %v287, 1
        %v401 = vrot.slane %v288, 1
        %v402 = vsel %vm374, %v400, %v401
        %v403 = vrot.slane %v289, 1
        %v404 = vsel %vm374, %v401, %v403
        %v405 = vrot.slane %v290, 1
        %v406 = vrot.slane %v291, 1
        %v407 = vsel %vm374, %v405, %v406
        %v408 = vrot.slane %v292, 1
        %v409 = vsel %vm374, %v406, %v408
        %v410 = vrot.slane %v293, 1
        %v411 = vrot.slane %v294, 1
        %v412 = vsel %vm374, %v410, %v411
        %v413 = vrot.slane %v295, 1
        %v414 = vsel %vm374, %v411, %v413
        %v415 = vrot.slane %v296, 1
        %v416 = vrot.slane %v297, 1
        %v417 = vsel %vm374, %v415, %v416
        %v418 = vrot.slane %v298, 1
        %v419 = vsel %vm374, %v416, %v418
        %v420 = vrot.slane %v299, 1
        %v421 = vrot.slane %v300, 1
        %v422 = vsel %vm374, %v420, %v421
        %v423 = vrot.slane %v301, 1
        %v424 = vsel %vm374, %v421, %v423
        %v425 = vrot.slane %v302, 1
        %v426 = vrot.slane %v303, 1
        %v427 = vsel %vm374, %v425, %v426
        %v428 = vrot.slane %v304, 1
        %v429 = vsel %vm374, %v426, %v428
        %v430 = vrot.slane %v305, 1
        %v431 = vrot.slane %v306, 1
        %v432 = vsel %vm374, %v430, %v431
        %v433 = vrot.slane %v307, 1
        %v434 = vsel %vm374, %v431, %v433
        %v435 = vrot.slane %v308, 1
        %v436 = vrot.slane %v309, 1
        %v437 = vsel %vm374, %v435, %v436
        %v438 = vrot.slane %v310, 1
        %v439 = vsel %vm374, %v436, %v438
        %v440 = vrot.slane %v311, 1
        %v441 = vrot.slane %v312, 1
        %v442 = vsel %vm374, %v440, %v441
        %v443 = vrot.slane %v313, 1
        %v444 = vsel %vm374, %v441, %v443
        %v445 = vrot.slane %v314, 1
        %v446 = vrot.slane %v315, 1
        %v447 = vsel %vm374, %v445, %v446
        %v448 = vrot.slane %v316, 1
        %v449 = vsel %vm374, %v446, %v448
        %v450 = vrot.slane %v317, 1
        %v451 = vrot.slane %v318, 1
        %v452 = vsel %vm374, %v450, %v451
        %v453 = vrot.slane %v319, 1
        %v454 = vsel %vm374, %v451, %v453
        %vm455 = vcmask 1045504
        %v456 = vrot.slane %v272, 2
        %v457 = vrot.slane %v273, 2
        %v458 = vsel %vm455, %v456, %v457
        %v459 = vrot.slane %v274, 2
        %v460 = vsel %vm455, %v457, %v459
        %v461 = vrot.slane %v275, 2
        %v462 = vrot.slane %v276, 2
        %v463 = vsel %vm455, %v461, %v462
        %v464 = vrot.slane %v277, 2
        %v465 = vsel %vm455, %v462, %v464
        %v466 = vrot.slane %v278, 2
        %v467 = vrot.slane %v279, 2
        %v468 = vsel %vm455, %v466, %v467
        %v469 = vrot.slane %v280, 2
        %v470 = vsel %vm455, %v467, %v469
        %v471 = vrot.slane %v281, 2
        %v472 = vrot.slane %v282, 2
        %v473 = vsel %vm455, %v471, %v472
        %v474 = vrot.slane %v283, 2
        %v475 = vsel %vm455, %v472, %v474
        %v476 = vrot.slane %v284, 2
        %v477 = vrot.slane %v285, 2
        %v478 = vsel %vm455, %v476, %v477
        %v479 = vrot.slane %v286, 2
        %v480 = vsel %vm455, %v477, %v479
        %v481 = vrot.slane %v287, 2
        %v482 = vrot.slane %v288, 2
        %v483 = vsel %vm455, %v481, %v482
        %v484 = vrot.slane %v289, 2
        %v485 = vsel %vm455, %v482, %v484
        %v486 = vrot.slane %v290, 2
        %v487 = vrot.slane %v291, 2
        %v488 = vsel %vm455, %v486, %v487
        %v489 = vrot.slane %v292, 2
        %v490 = vsel %vm455, %v487, %v489
        %v491 = vrot.slane %v293, 2
        %v492 = vrot.slane %v294, 2
        %v493 = vsel %vm455, %v491, %v492
        %v494 = vrot.slane %v295, 2
        %v495 = vsel %vm455, %v492, %v494
        %v496 = vrot.slane %v296, 2
        %v497 = vrot.slane %v297, 2
        %v498 = vsel %vm455, %v496, %v497
        %v499 = vrot.slane %v298, 2
        %v500 = vsel %vm455, %v497, %v499
        %v501 = vrot.slane %v299, 2
        %v502 = vrot.slane %v300, 2
        %v503 = vsel %vm455, %v501, %v502
        %v504 = vrot.slane %v301, 2
        %v505 = vsel %vm455, %v502, %v504
        %v506 = vrot.slane %v302, 2
        %v507 = vrot.slane %v303, 2
        %v508 = vsel %vm455, %v506, %v507
        %v509 = vrot.slane %v304, 2
        %v510 = vsel %vm455, %v507, %v509
        %v511 = vrot.slane %v305, 2
        %v512 = vrot.slane %v306, 2
        %v513 = vsel %vm455, %v511, %v512
        %v514 = vrot.slane %v307, 2
        %v515 = vsel %vm455, %v512, %v514
        %v516 = vrot.slane %v308, 2
        %v517 = vrot.slane %v309, 2
        %v518 = vsel %vm455, %v516, %v517
        %v519 = vrot.slane %v310, 2
        %v520 = vsel %vm455, %v517, %v519
        %v521 = vrot.slane %v311, 2
        %v522 = vrot.slane %v312, 2
        %v523 = vsel %vm455, %v521, %v522
        %v524 = vrot.slane %v313, 2
        %v525 = vsel %vm455, %v522, %v524
        %v526 = vrot.slane %v314, 2
        %v527 = vrot.slane %v315, 2
        %v528 = vsel %vm455, %v526, %v527
        %v529 = vrot.slane %v316, 2
        %v530 = vsel %vm455, %v527, %v529
        %v531 = vrot.slane %v317, 2
        %v532 = vrot.slane %v318, 2
        %v533 = vsel %vm455, %v531, %v532
        %v534 = vrot.slane %v319, 2
        %v535 = vsel %vm455, %v532, %v534
        %v539 = vrot.slane %v320, 1
        %v540 = vrot.slane %v321, 1
        %v541 = vsel %vm374, %v539, %v540
        %v542 = vrot.slane %v322, 1
        %v543 = vsel %vm374, %v540, %v542
        %v544 = vrot.slane %v320, 2
        %v545 = vrot.slane %v321, 2
        %v546 = vsel %vm455, %v544, %v545
        %v547 = vrot.slane %v322, 2
        %v548 = vsel %vm455, %v545, %v547
        %v552 = vrot.slane %v323, 1
        %v553 = vrot.slane %v324, 1
        %v554 = vsel %vm374, %v552, %v553
        %v555 = vrot.slane %v325, 1
        %v556 = vsel %vm374, %v553, %v555
        %v557 = vrot.slane %v323, 2
        %v558 = vrot.slane %v324, 2
        %v559 = vsel %vm455, %v557, %v558
        %v560 = vrot.slane %v325, 2
        %v561 = vsel %vm455, %v558, %v560
        %562 = vrot.lane.b32.xlu0 %v377, 4
        %v563 = vpop.permute.xlu0 %562
        %564 = vrot.lane.b32.xlu0 %v379, 4
        %v565 = vpop.permute.xlu0 %564
        %566 = vrot.lane.b32.xlu0 %v382, 4
        %v567 = vpop.permute.xlu0 %566
        %568 = vrot.lane.b32.xlu0 %v384, 4
        %v569 = vpop.permute.xlu0 %568
        %570 = vrot.lane.b32.xlu0 %v387, 4
        %v571 = vpop.permute.xlu0 %570
        %572 = vrot.lane.b32.xlu0 %v389, 4
        %v573 = vpop.permute.xlu0 %572
        %574 = vrot.lane.b32.xlu0 %v392, 4
        %v575 = vpop.permute.xlu0 %574
        %576 = vrot.lane.b32.xlu0 %v394, 4
        %v577 = vpop.permute.xlu0 %576
        %578 = vrot.lane.b32.xlu0 %v397, 4
        %v579 = vpop.permute.xlu0 %578
        %580 = vrot.lane.b32.xlu0 %v399, 4
        %v581 = vpop.permute.xlu0 %580
        %582 = vrot.lane.b32.xlu0 %v402, 4
        %v583 = vpop.permute.xlu0 %582
        %584 = vrot.lane.b32.xlu0 %v404, 4
        %v585 = vpop.permute.xlu0 %584
        %586 = vrot.lane.b32.xlu0 %v407, 4
        %v587 = vpop.permute.xlu0 %586
        %588 = vrot.lane.b32.xlu0 %v409, 4
        %v589 = vpop.permute.xlu0 %588
        %590 = vrot.lane.b32.xlu0 %v412, 4
        %v591 = vpop.permute.xlu0 %590
        %592 = vrot.lane.b32.xlu0 %v414, 4
        %v593 = vpop.permute.xlu0 %592
        %594 = vrot.lane.b32.xlu0 %v417, 4
        %v595 = vpop.permute.xlu0 %594
        %596 = vrot.lane.b32.xlu0 %v419, 4
        %v597 = vpop.permute.xlu0 %596
        %598 = vrot.lane.b32.xlu0 %v422, 4
        %v599 = vpop.permute.xlu0 %598
        %600 = vrot.lane.b32.xlu0 %v424, 4
        %v601 = vpop.permute.xlu0 %600
        %602 = vrot.lane.b32.xlu0 %v427, 4
        %v603 = vpop.permute.xlu0 %602
        %604 = vrot.lane.b32.xlu0 %v429, 4
        %v605 = vpop.permute.xlu0 %604
        %606 = vrot.lane.b32.xlu0 %v432, 4
        %v607 = vpop.permute.xlu0 %606
        %608 = vrot.lane.b32.xlu0 %v434, 4
        %v609 = vpop.permute.xlu0 %608
        %610 = vrot.lane.b32.xlu0 %v437, 4
        %v611 = vpop.permute.xlu0 %610
        %612 = vrot.lane.b32.xlu0 %v439, 4
        %v613 = vpop.permute.xlu0 %612
        %614 = vrot.lane.b32.xlu0 %v442, 4
        %v615 = vpop.permute.xlu0 %614
        %616 = vrot.lane.b32.xlu0 %v444, 4
        %v617 = vpop.permute.xlu0 %616
        %618 = vrot.lane.b32.xlu0 %v447, 4
        %v619 = vpop.permute.xlu0 %618
        %620 = vrot.lane.b32.xlu0 %v449, 4
        %v621 = vpop.permute.xlu0 %620
        %622 = vrot.lane.b32.xlu0 %v452, 4
        %v623 = vpop.permute.xlu0 %622
        %624 = vrot.lane.b32.xlu0 %v454, 4
        %v625 = vpop.permute.xlu0 %624
        %658 = vrot.lane.b32.xlu0 %v458, 8
        %v659 = vpop.permute.xlu0 %658
        %660 = vrot.lane.b32.xlu0 %v460, 8
        %v661 = vpop.permute.xlu0 %660
        %662 = vrot.lane.b32.xlu0 %v463, 8
        %v663 = vpop.permute.xlu0 %662
        %664 = vrot.lane.b32.xlu0 %v465, 8
        %v665 = vpop.permute.xlu0 %664
        %666 = vrot.lane.b32.xlu0 %v468, 8
        %v667 = vpop.permute.xlu0 %666
        %668 = vrot.lane.b32.xlu0 %v470, 8
        %v669 = vpop.permute.xlu0 %668
        %670 = vrot.lane.b32.xlu0 %v473, 8
        %v671 = vpop.permute.xlu0 %670
        %672 = vrot.lane.b32.xlu0 %v475, 8
        %v673 = vpop.permute.xlu0 %672
        %674 = vrot.lane.b32.xlu0 %v478, 8
        %v675 = vpop.permute.xlu0 %674
        %676 = vrot.lane.b32.xlu0 %v480, 8
        %v677 = vpop.permute.xlu0 %676
        %678 = vrot.lane.b32.xlu0 %v483, 8
        %v679 = vpop.permute.xlu0 %678
        %680 = vrot.lane.b32.xlu0 %v485, 8
        %v681 = vpop.permute.xlu0 %680
        %682 = vrot.lane.b32.xlu0 %v488, 8
        %v683 = vpop.permute.xlu0 %682
        %684 = vrot.lane.b32.xlu0 %v490, 8
        %v685 = vpop.permute.xlu0 %684
        %686 = vrot.lane.b32.xlu0 %v493, 8
        %v687 = vpop.permute.xlu0 %686
        %688 = vrot.lane.b32.xlu0 %v495, 8
        %v689 = vpop.permute.xlu0 %688
        %690 = vrot.lane.b32.xlu0 %v498, 8
        %v691 = vpop.permute.xlu0 %690
        %692 = vrot.lane.b32.xlu0 %v500, 8
        %v693 = vpop.permute.xlu0 %692
        %694 = vrot.lane.b32.xlu0 %v503, 8
        %v695 = vpop.permute.xlu0 %694
        %696 = vrot.lane.b32.xlu0 %v505, 8
        %v697 = vpop.permute.xlu0 %696
        %698 = vrot.lane.b32.xlu0 %v508, 8
        %v699 = vpop.permute.xlu0 %698
        %700 = vrot.lane.b32.xlu0 %v510, 8
        %v701 = vpop.permute.xlu0 %700
        %702 = vrot.lane.b32.xlu0 %v513, 8
        %v703 = vpop.permute.xlu0 %702
        %704 = vrot.lane.b32.xlu0 %v515, 8
        %v705 = vpop.permute.xlu0 %704
        %706 = vrot.lane.b32.xlu0 %v518, 8
        %v707 = vpop.permute.xlu0 %706
        %708 = vrot.lane.b32.xlu0 %v520, 8
        %v709 = vpop.permute.xlu0 %708
        %710 = vrot.lane.b32.xlu0 %v523, 8
        %v711 = vpop.permute.xlu0 %710
        %712 = vrot.lane.b32.xlu0 %v525, 8
        %v713 = vpop.permute.xlu0 %712
        %714 = vrot.lane.b32.xlu0 %v528, 8
        %v715 = vpop.permute.xlu0 %714
        %716 = vrot.lane.b32.xlu0 %v530, 8
        %v717 = vpop.permute.xlu0 %716
        %718 = vrot.lane.b32.xlu0 %v533, 8
        %v719 = vpop.permute.xlu0 %718
        %720 = vrot.lane.b32.xlu0 %v535, 8
        %v721 = vpop.permute.xlu0 %720
        %754 = vrot.lane.b32.xlu0 %v275, 12
        %v755 = vpop.permute.xlu0 %754
        %756 = vrot.lane.b32.xlu0 %v276, 12
        %v757 = vpop.permute.xlu0 %756
        %758 = vrot.lane.b32.xlu0 %v278, 12
        %v759 = vpop.permute.xlu0 %758
        %760 = vrot.lane.b32.xlu0 %v279, 12
        %v761 = vpop.permute.xlu0 %760
        %762 = vrot.lane.b32.xlu0 %v281, 12
        %v763 = vpop.permute.xlu0 %762
        %764 = vrot.lane.b32.xlu0 %v282, 12
        %v765 = vpop.permute.xlu0 %764
        %766 = vrot.lane.b32.xlu0 %v284, 12
        %v767 = vpop.permute.xlu0 %766
        %768 = vrot.lane.b32.xlu0 %v285, 12
        %v769 = vpop.permute.xlu0 %768
        %770 = vrot.lane.b32.xlu0 %v287, 12
        %v771 = vpop.permute.xlu0 %770
        %772 = vrot.lane.b32.xlu0 %v288, 12
        %v773 = vpop.permute.xlu0 %772
        %774 = vrot.lane.b32.xlu0 %v290, 12
        %v775 = vpop.permute.xlu0 %774
        %776 = vrot.lane.b32.xlu0 %v291, 12
        %v777 = vpop.permute.xlu0 %776
        %778 = vrot.lane.b32.xlu0 %v293, 12
        %v779 = vpop.permute.xlu0 %778
        %780 = vrot.lane.b32.xlu0 %v294, 12
        %v781 = vpop.permute.xlu0 %780
        %782 = vrot.lane.b32.xlu0 %v296, 12
        %v783 = vpop.permute.xlu0 %782
        %784 = vrot.lane.b32.xlu0 %v297, 12
        %v785 = vpop.permute.xlu0 %784
        %786 = vrot.lane.b32.xlu0 %v299, 12
        %v787 = vpop.permute.xlu0 %786
        %788 = vrot.lane.b32.xlu0 %v300, 12
        %v789 = vpop.permute.xlu0 %788
        %790 = vrot.lane.b32.xlu0 %v302, 12
        %v791 = vpop.permute.xlu0 %790
        %792 = vrot.lane.b32.xlu0 %v303, 12
        %v793 = vpop.permute.xlu0 %792
        %794 = vrot.lane.b32.xlu0 %v305, 12
        %v795 = vpop.permute.xlu0 %794
        %796 = vrot.lane.b32.xlu0 %v306, 12
        %v797 = vpop.permute.xlu0 %796
        %798 = vrot.lane.b32.xlu0 %v308, 12
        %v799 = vpop.permute.xlu0 %798
        %800 = vrot.lane.b32.xlu0 %v309, 12
        %v801 = vpop.permute.xlu0 %800
        %802 = vrot.lane.b32.xlu0 %v311, 12
        %v803 = vpop.permute.xlu0 %802
        %804 = vrot.lane.b32.xlu0 %v312, 12
        %v805 = vpop.permute.xlu0 %804
        %806 = vrot.lane.b32.xlu0 %v314, 12
        %v807 = vpop.permute.xlu0 %806
        %808 = vrot.lane.b32.xlu0 %v315, 12
        %v809 = vpop.permute.xlu0 %808
        %810 = vrot.lane.b32.xlu0 %v317, 12
        %v811 = vpop.permute.xlu0 %810
        %812 = vrot.lane.b32.xlu0 %v318, 12
        %v813 = vpop.permute.xlu0 %812
        %814 = vrot.lane.b32.xlu0 %v320, 12
        %v815 = vpop.permute.xlu0 %814
        %816 = vrot.lane.b32.xlu0 %v321, 12
        %v817 = vpop.permute.xlu0 %816
        %850 = vrot.lane.b32.xlu0 %v382, 16
        %v851 = vpop.permute.xlu0 %850
        %852 = vrot.lane.b32.xlu0 %v384, 16
        %v853 = vpop.permute.xlu0 %852
        %854 = vrot.lane.b32.xlu0 %v387, 16
        %v855 = vpop.permute.xlu0 %854
        %856 = vrot.lane.b32.xlu0 %v389, 16
        %v857 = vpop.permute.xlu0 %856
        %858 = vrot.lane.b32.xlu0 %v392, 16
        %v859 = vpop.permute.xlu0 %858
        %860 = vrot.lane.b32.xlu0 %v394, 16
        %v861 = vpop.permute.xlu0 %860
        %862 = vrot.lane.b32.xlu0 %v397, 16
        %v863 = vpop.permute.xlu0 %862
        %864 = vrot.lane.b32.xlu0 %v399, 16
        %v865 = vpop.permute.xlu0 %864
        %866 = vrot.lane.b32.xlu0 %v402, 16
        %v867 = vpop.permute.xlu0 %866
        %868 = vrot.lane.b32.xlu0 %v404, 16
        %v869 = vpop.permute.xlu0 %868
        %870 = vrot.lane.b32.xlu0 %v407, 16
        %v871 = vpop.permute.xlu0 %870
        %872 = vrot.lane.b32.xlu0 %v409, 16
        %v873 = vpop.permute.xlu0 %872
        %874 = vrot.lane.b32.xlu0 %v412, 16
        %v875 = vpop.permute.xlu0 %874
        %876 = vrot.lane.b32.xlu0 %v414, 16
        %v877 = vpop.permute.xlu0 %876
        %878 = vrot.lane.b32.xlu0 %v417, 16
        %v879 = vpop.permute.xlu0 %878
        %880 = vrot.lane.b32.xlu0 %v419, 16
        %v881 = vpop.permute.xlu0 %880
        %882 = vrot.lane.b32.xlu0 %v422, 16
        %v883 = vpop.permute.xlu0 %882
        %884 = vrot.lane.b32.xlu0 %v424, 16
        %v885 = vpop.permute.xlu0 %884
        %886 = vrot.lane.b32.xlu0 %v427, 16
        %v887 = vpop.permute.xlu0 %886
        %888 = vrot.lane.b32.xlu0 %v429, 16
        %v889 = vpop.permute.xlu0 %888
        %890 = vrot.lane.b32.xlu0 %v432, 16
        %v891 = vpop.permute.xlu0 %890
        %892 = vrot.lane.b32.xlu0 %v434, 16
        %v893 = vpop.permute.xlu0 %892
        %894 = vrot.lane.b32.xlu0 %v437, 16
        %v895 = vpop.permute.xlu0 %894
        %896 = vrot.lane.b32.xlu0 %v439, 16
        %v897 = vpop.permute.xlu0 %896
        %898 = vrot.lane.b32.xlu0 %v442, 16
        %v899 = vpop.permute.xlu0 %898
        %900 = vrot.lane.b32.xlu0 %v444, 16
        %v901 = vpop.permute.xlu0 %900
        %902 = vrot.lane.b32.xlu0 %v447, 16
        %v903 = vpop.permute.xlu0 %902
        %904 = vrot.lane.b32.xlu0 %v449, 16
        %v905 = vpop.permute.xlu0 %904
        %906 = vrot.lane.b32.xlu0 %v452, 16
        %v907 = vpop.permute.xlu0 %906
        %908 = vrot.lane.b32.xlu0 %v454, 16
        %v909 = vpop.permute.xlu0 %908
        %910 = vrot.lane.b32.xlu0 %v541, 16
        %v911 = vpop.permute.xlu0 %910
        %912 = vrot.lane.b32.xlu0 %v543, 16
        %v913 = vpop.permute.xlu0 %912
        %946 = vrot.lane.b32.xlu0 %v463, 20
        %v947 = vpop.permute.xlu0 %946
        %948 = vrot.lane.b32.xlu0 %v465, 20
        %v949 = vpop.permute.xlu0 %948
        %950 = vrot.lane.b32.xlu0 %v468, 20
        %v951 = vpop.permute.xlu0 %950
        %952 = vrot.lane.b32.xlu0 %v470, 20
        %v953 = vpop.permute.xlu0 %952
        %954 = vrot.lane.b32.xlu0 %v473, 20
        %v955 = vpop.permute.xlu0 %954
        %956 = vrot.lane.b32.xlu0 %v475, 20
        %v957 = vpop.permute.xlu0 %956
        %958 = vrot.lane.b32.xlu0 %v478, 20
        %v959 = vpop.permute.xlu0 %958
        %960 = vrot.lane.b32.xlu0 %v480, 20
        %v961 = vpop.permute.xlu0 %960
        %962 = vrot.lane.b32.xlu0 %v483, 20
        %v963 = vpop.permute.xlu0 %962
        %964 = vrot.lane.b32.xlu0 %v485, 20
        %v965 = vpop.permute.xlu0 %964
        %966 = vrot.lane.b32.xlu0 %v488, 20
        %v967 = vpop.permute.xlu0 %966
        %968 = vrot.lane.b32.xlu0 %v490, 20
        %v969 = vpop.permute.xlu0 %968
        %970 = vrot.lane.b32.xlu0 %v493, 20
        %v971 = vpop.permute.xlu0 %970
        %972 = vrot.lane.b32.xlu0 %v495, 20
        %v973 = vpop.permute.xlu0 %972
        %974 = vrot.lane.b32.xlu0 %v498, 20
        %v975 = vpop.permute.xlu0 %974
        %976 = vrot.lane.b32.xlu0 %v500, 20
        %v977 = vpop.permute.xlu0 %976
        %978 = vrot.lane.b32.xlu0 %v503, 20
        %v979 = vpop.permute.xlu0 %978
        %980 = vrot.lane.b32.xlu0 %v505, 20
        %v981 = vpop.permute.xlu0 %980
        %982 = vrot.lane.b32.xlu0 %v508, 20
        %v983 = vpop.permute.xlu0 %982
        %984 = vrot.lane.b32.xlu0 %v510, 20
        %v985 = vpop.permute.xlu0 %984
        %986 = vrot.lane.b32.xlu0 %v513, 20
        %v987 = vpop.permute.xlu0 %986
        %988 = vrot.lane.b32.xlu0 %v515, 20
        %v989 = vpop.permute.xlu0 %988
        %990 = vrot.lane.b32.xlu0 %v518, 20
        %v991 = vpop.permute.xlu0 %990
        %992 = vrot.lane.b32.xlu0 %v520, 20
        %v993 = vpop.permute.xlu0 %992
        %994 = vrot.lane.b32.xlu0 %v523, 20
        %v995 = vpop.permute.xlu0 %994
        %996 = vrot.lane.b32.xlu0 %v525, 20
        %v997 = vpop.permute.xlu0 %996
        %998 = vrot.lane.b32.xlu0 %v528, 20
        %v999 = vpop.permute.xlu0 %998
        %1000 = vrot.lane.b32.xlu0 %v530, 20
        %v1001 = vpop.permute.xlu0 %1000
        %1002 = vrot.lane.b32.xlu0 %v533, 20
        %v1003 = vpop.permute.xlu0 %1002
        %1004 = vrot.lane.b32.xlu0 %v535, 20
        %v1005 = vpop.permute.xlu0 %1004
        %1006 = vrot.lane.b32.xlu0 %v546, 20
        %v1007 = vpop.permute.xlu0 %1006
        %1008 = vrot.lane.b32.xlu0 %v548, 20
        %v1009 = vpop.permute.xlu0 %1008
        %1042 = vrot.lane.b32.xlu0 %v278, 24
        %v1043 = vpop.permute.xlu0 %1042
        %1044 = vrot.lane.b32.xlu0 %v279, 24
        %v1045 = vpop.permute.xlu0 %1044
        %1046 = vrot.lane.b32.xlu0 %v281, 24
        %v1047 = vpop.permute.xlu0 %1046
        %1048 = vrot.lane.b32.xlu0 %v282, 24
        %v1049 = vpop.permute.xlu0 %1048
        %1050 = vrot.lane.b32.xlu0 %v284, 24
        %v1051 = vpop.permute.xlu0 %1050
        %1052 = vrot.lane.b32.xlu0 %v285, 24
        %v1053 = vpop.permute.xlu0 %1052
        %1054 = vrot.lane.b32.xlu0 %v287, 24
        %v1055 = vpop.permute.xlu0 %1054
        %1056 = vrot.lane.b32.xlu0 %v288, 24
        %v1057 = vpop.permute.xlu0 %1056
        %1058 = vrot.lane.b32.xlu0 %v290, 24
        %v1059 = vpop.permute.xlu0 %1058
        %1060 = vrot.lane.b32.xlu0 %v291, 24
        %v1061 = vpop.permute.xlu0 %1060
        %1062 = vrot.lane.b32.xlu0 %v293, 24
        %v1063 = vpop.permute.xlu0 %1062
        %1064 = vrot.lane.b32.xlu0 %v294, 24
        %v1065 = vpop.permute.xlu0 %1064
        %1066 = vrot.lane.b32.xlu0 %v296, 24
        %v1067 = vpop.permute.xlu0 %1066
        %1068 = vrot.lane.b32.xlu0 %v297, 24
        %v1069 = vpop.permute.xlu0 %1068
        %1070 = vrot.lane.b32.xlu0 %v299, 24
        %v1071 = vpop.permute.xlu0 %1070
        %1072 = vrot.lane.b32.xlu0 %v300, 24
        %v1073 = vpop.permute.xlu0 %1072
        %1074 = vrot.lane.b32.xlu0 %v302, 24
        %v1075 = vpop.permute.xlu0 %1074
        %1076 = vrot.lane.b32.xlu0 %v303, 24
        %v1077 = vpop.permute.xlu0 %1076
        %1078 = vrot.lane.b32.xlu0 %v305, 24
        %v1079 = vpop.permute.xlu0 %1078
        %1080 = vrot.lane.b32.xlu0 %v306, 24
        %v1081 = vpop.permute.xlu0 %1080
        %1082 = vrot.lane.b32.xlu0 %v308, 24
        %v1083 = vpop.permute.xlu0 %1082
        %1084 = vrot.lane.b32.xlu0 %v309, 24
        %v1085 = vpop.permute.xlu0 %1084
        %1086 = vrot.lane.b32.xlu0 %v311, 24
        %v1087 = vpop.permute.xlu0 %1086
        %1088 = vrot.lane.b32.xlu0 %v312, 24
        %v1089 = vpop.permute.xlu0 %1088
        %1090 = vrot.lane.b32.xlu0 %v314, 24
        %v1091 = vpop.permute.xlu0 %1090
        %1092 = vrot.lane.b32.xlu0 %v315, 24
        %v1093 = vpop.permute.xlu0 %1092
        %1094 = vrot.lane.b32.xlu0 %v317, 24
        %v1095 = vpop.permute.xlu0 %1094
        %1096 = vrot.lane.b32.xlu0 %v318, 24
        %v1097 = vpop.permute.xlu0 %1096
        %1098 = vrot.lane.b32.xlu0 %v320, 24
        %v1099 = vpop.permute.xlu0 %1098
        %1100 = vrot.lane.b32.xlu0 %v321, 24
        %v1101 = vpop.permute.xlu0 %1100
        %1102 = vrot.lane.b32.xlu0 %v323, 24
        %v1103 = vpop.permute.xlu0 %1102
        %1104 = vrot.lane.b32.xlu0 %v324, 24
        %v1105 = vpop.permute.xlu0 %1104
        %1138 = vrot.lane.b32.xlu0 %v387, 28
        %v1139 = vpop.permute.xlu0 %1138
        %1140 = vrot.lane.b32.xlu0 %v389, 28
        %v1141 = vpop.permute.xlu0 %1140
        %1142 = vrot.lane.b32.xlu0 %v392, 28
        %v1143 = vpop.permute.xlu0 %1142
        %1144 = vrot.lane.b32.xlu0 %v394, 28
        %v1145 = vpop.permute.xlu0 %1144
        %1146 = vrot.lane.b32.xlu0 %v397, 28
        %v1147 = vpop.permute.xlu0 %1146
        %1148 = vrot.lane.b32.xlu0 %v399, 28
        %v1149 = vpop.permute.xlu0 %1148
        %1150 = vrot.lane.b32.xlu0 %v402, 28
        %v1151 = vpop.permute.xlu0 %1150
        %1152 = vrot.lane.b32.xlu0 %v404, 28
        %v1153 = vpop.permute.xlu0 %1152
        %1154 = vrot.lane.b32.xlu0 %v407, 28
        %v1155 = vpop.permute.xlu0 %1154
        %1156 = vrot.lane.b32.xlu0 %v409, 28
        %v1157 = vpop.permute.xlu0 %1156
        %1158 = vrot.lane.b32.xlu0 %v412, 28
        %v1159 = vpop.permute.xlu0 %1158
        %1160 = vrot.lane.b32.xlu0 %v414, 28
        %v1161 = vpop.permute.xlu0 %1160
        %1162 = vrot.lane.b32.xlu0 %v417, 28
        %v1163 = vpop.permute.xlu0 %1162
        %1164 = vrot.lane.b32.xlu0 %v419, 28
        %v1165 = vpop.permute.xlu0 %1164
        %1166 = vrot.lane.b32.xlu0 %v422, 28
        %v1167 = vpop.permute.xlu0 %1166
        %1168 = vrot.lane.b32.xlu0 %v424, 28
        %v1169 = vpop.permute.xlu0 %1168
        %1170 = vrot.lane.b32.xlu0 %v427, 28
        %v1171 = vpop.permute.xlu0 %1170
        %1172 = vrot.lane.b32.xlu0 %v429, 28
        %v1173 = vpop.permute.xlu0 %1172
        %1174 = vrot.lane.b32.xlu0 %v432, 28
        %v1175 = vpop.permute.xlu0 %1174
        %1176 = vrot.lane.b32.xlu0 %v434, 28
        %v1177 = vpop.permute.xlu0 %1176
        %1178 = vrot.lane.b32.xlu0 %v437, 28
        %v1179 = vpop.permute.xlu0 %1178
        %1180 = vrot.lane.b32.xlu0 %v439, 28
        %v1181 = vpop.permute.xlu0 %1180
        %1182 = vrot.lane.b32.xlu0 %v442, 28
        %v1183 = vpop.permute.xlu0 %1182
        %1184 = vrot.lane.b32.xlu0 %v444, 28
        %v1185 = vpop.permute.xlu0 %1184
        %1186 = vrot.lane.b32.xlu0 %v447, 28
        %v1187 = vpop.permute.xlu0 %1186
        %1188 = vrot.lane.b32.xlu0 %v449, 28
        %v1189 = vpop.permute.xlu0 %1188
        %1190 = vrot.lane.b32.xlu0 %v452, 28
        %v1191 = vpop.permute.xlu0 %1190
        %1192 = vrot.lane.b32.xlu0 %v454, 28
        %v1193 = vpop.permute.xlu0 %1192
        %1194 = vrot.lane.b32.xlu0 %v541, 28
        %v1195 = vpop.permute.xlu0 %1194
        %1196 = vrot.lane.b32.xlu0 %v543, 28
        %v1197 = vpop.permute.xlu0 %1196
        %1198 = vrot.lane.b32.xlu0 %v554, 28
        %v1199 = vpop.permute.xlu0 %1198
        %1200 = vrot.lane.b32.xlu0 %v556, 28
        %v1201 = vpop.permute.xlu0 %1200
        %1234 = vrot.lane.b32.xlu0 %v468, 32
        %v1235 = vpop.permute.xlu0 %1234
        %1236 = vrot.lane.b32.xlu0 %v470, 32
        %v1237 = vpop.permute.xlu0 %1236
        %1238 = vrot.lane.b32.xlu0 %v473, 32
        %v1239 = vpop.permute.xlu0 %1238
        %1240 = vrot.lane.b32.xlu0 %v475, 32
        %v1241 = vpop.permute.xlu0 %1240
        %1242 = vrot.lane.b32.xlu0 %v478, 32
        %v1243 = vpop.permute.xlu0 %1242
        %1244 = vrot.lane.b32.xlu0 %v480, 32
        %v1245 = vpop.permute.xlu0 %1244
        %1246 = vrot.lane.b32.xlu0 %v483, 32
        %v1247 = vpop.permute.xlu0 %1246
        %1248 = vrot.lane.b32.xlu0 %v485, 32
        %v1249 = vpop.permute.xlu0 %1248
        %1250 = vrot.lane.b32.xlu0 %v488, 32
        %v1251 = vpop.permute.xlu0 %1250
        %1252 = vrot.lane.b32.xlu0 %v490, 32
        %v1253 = vpop.permute.xlu0 %1252
        %1254 = vrot.lane.b32.xlu0 %v493, 32
        %v1255 = vpop.permute.xlu0 %1254
        %1256 = vrot.lane.b32.xlu0 %v495, 32
        %v1257 = vpop.permute.xlu0 %1256
        %1258 = vrot.lane.b32.xlu0 %v498, 32
        %v1259 = vpop.permute.xlu0 %1258
        %1260 = vrot.lane.b32.xlu0 %v500, 32
        %v1261 = vpop.permute.xlu0 %1260
        %1262 = vrot.lane.b32.xlu0 %v503, 32
        %v1263 = vpop.permute.xlu0 %1262
        %1264 = vrot.lane.b32.xlu0 %v505, 32
        %v1265 = vpop.permute.xlu0 %1264
        %1266 = vrot.lane.b32.xlu0 %v508, 32
        %v1267 = vpop.permute.xlu0 %1266
        %1268 = vrot.lane.b32.xlu0 %v510, 32
        %v1269 = vpop.permute.xlu0 %1268
        %1270 = vrot.lane.b32.xlu0 %v513, 32
        %v1271 = vpop.permute.xlu0 %1270
        %1272 = vrot.lane.b32.xlu0 %v515, 32
        %v1273 = vpop.permute.xlu0 %1272
        %1274 = vrot.lane.b32.xlu0 %v518, 32
        %v1275 = vpop.permute.xlu0 %1274
        %1276 = vrot.lane.b32.xlu0 %v520, 32
        %v1277 = vpop.permute.xlu0 %1276
        %1278 = vrot.lane.b32.xlu0 %v523, 32
        %v1279 = vpop.permute.xlu0 %1278
        %1280 = vrot.lane.b32.xlu0 %v525, 32
        %v1281 = vpop.permute.xlu0 %1280
        %1282 = vrot.lane.b32.xlu0 %v528, 32
        %v1283 = vpop.permute.xlu0 %1282
        %1284 = vrot.lane.b32.xlu0 %v530, 32
        %v1285 = vpop.permute.xlu0 %1284
        %1286 = vrot.lane.b32.xlu0 %v533, 32
        %v1287 = vpop.permute.xlu0 %1286
        %1288 = vrot.lane.b32.xlu0 %v535, 32
        %v1289 = vpop.permute.xlu0 %1288
        %1290 = vrot.lane.b32.xlu0 %v546, 32
        %v1291 = vpop.permute.xlu0 %1290
        %1292 = vrot.lane.b32.xlu0 %v548, 32
        %v1293 = vpop.permute.xlu0 %1292
        %1294 = vrot.lane.b32.xlu0 %v559, 32
        %v1295 = vpop.permute.xlu0 %1294
        %1296 = vrot.lane.b32.xlu0 %v561, 32
        %v1297 = vpop.permute.xlu0 %1296
        %vm1330 = vcmask 31744
        %v1331 = vsel %vm1330, %v272, %v563
        %v1332 = vsel %vm1330, %v273, %v565
        %v1333 = vsel %vm1330, %v275, %v567
        %v1334 = vsel %vm1330, %v276, %v569
        %v1335 = vsel %vm1330, %v278, %v571
        %v1336 = vsel %vm1330, %v279, %v573
        %v1337 = vsel %vm1330, %v281, %v575
        %v1338 = vsel %vm1330, %v282, %v577
        %v1339 = vsel %vm1330, %v284, %v579
        %v1340 = vsel %vm1330, %v285, %v581
        %v1341 = vsel %vm1330, %v287, %v583
        %v1342 = vsel %vm1330, %v288, %v585
        %v1343 = vsel %vm1330, %v290, %v587
        %v1344 = vsel %vm1330, %v291, %v589
        %v1345 = vsel %vm1330, %v293, %v591
        %v1346 = vsel %vm1330, %v294, %v593
        %v1347 = vsel %vm1330, %v296, %v595
        %v1348 = vsel %vm1330, %v297, %v597
        %v1349 = vsel %vm1330, %v299, %v599
        %v1350 = vsel %vm1330, %v300, %v601
        %v1351 = vsel %vm1330, %v302, %v603
        %v1352 = vsel %vm1330, %v303, %v605
        %v1353 = vsel %vm1330, %v305, %v607
        %v1354 = vsel %vm1330, %v306, %v609
        %v1355 = vsel %vm1330, %v308, %v611
        %v1356 = vsel %vm1330, %v309, %v613
        %v1357 = vsel %vm1330, %v311, %v615
        %v1358 = vsel %vm1330, %v312, %v617
        %v1359 = vsel %vm1330, %v314, %v619
        %v1360 = vsel %vm1330, %v315, %v621
        %v1361 = vsel %vm1330, %v317, %v623
        %v1362 = vsel %vm1330, %v318, %v625
        %vm1363 = vcmask 64512
        %v1364 = vsel %vm1363, %v1331, %v659
        %v1365 = vsel %vm1363, %v1332, %v661
        %v1366 = vsel %vm1363, %v1333, %v663
        %v1367 = vsel %vm1363, %v1334, %v665
        %v1368 = vsel %vm1363, %v1335, %v667
        %v1369 = vsel %vm1363, %v1336, %v669
        %v1370 = vsel %vm1363, %v1337, %v671
        %v1371 = vsel %vm1363, %v1338, %v673
        %v1372 = vsel %vm1363, %v1339, %v675
        %v1373 = vsel %vm1363, %v1340, %v677
        %v1374 = vsel %vm1363, %v1341, %v679
        %v1375 = vsel %vm1363, %v1342, %v681
        %v1376 = vsel %vm1363, %v1343, %v683
        %v1377 = vsel %vm1363, %v1344, %v685
        %v1378 = vsel %vm1363, %v1345, %v687
        %v1379 = vsel %vm1363, %v1346, %v689
        %v1380 = vsel %vm1363, %v1347, %v691
        %v1381 = vsel %vm1363, %v1348, %v693
        %v1382 = vsel %vm1363, %v1349, %v695
        %v1383 = vsel %vm1363, %v1350, %v697
        %v1384 = vsel %vm1363, %v1351, %v699
        %v1385 = vsel %vm1363, %v1352, %v701
        %v1386 = vsel %vm1363, %v1353, %v703
        %v1387 = vsel %vm1363, %v1354, %v705
        %v1388 = vsel %vm1363, %v1355, %v707
        %v1389 = vsel %vm1363, %v1356, %v709
        %v1390 = vsel %vm1363, %v1357, %v711
        %v1391 = vsel %vm1363, %v1358, %v713
        %v1392 = vsel %vm1363, %v1359, %v715
        %v1393 = vsel %vm1363, %v1360, %v717
        %v1394 = vsel %vm1363, %v1361, %v719
        %v1395 = vsel %vm1363, %v1362, %v721
        %vm1396 = vcmask 97280
        %v1397 = vsel %vm1396, %v1364, %v755
        %v1398 = vsel %vm1396, %v1365, %v757
        %v1399 = vsel %vm1396, %v1366, %v759
        %v1400 = vsel %vm1396, %v1367, %v761
        %v1401 = vsel %vm1396, %v1368, %v763
        %v1402 = vsel %vm1396, %v1369, %v765
        %v1403 = vsel %vm1396, %v1370, %v767
        %v1404 = vsel %vm1396, %v1371, %v769
        %v1405 = vsel %vm1396, %v1372, %v771
        %v1406 = vsel %vm1396, %v1373, %v773
        %v1407 = vsel %vm1396, %v1374, %v775
        %v1408 = vsel %vm1396, %v1375, %v777
        %v1409 = vsel %vm1396, %v1376, %v779
        %v1410 = vsel %vm1396, %v1377, %v781
        %v1411 = vsel %vm1396, %v1378, %v783
        %v1412 = vsel %vm1396, %v1379, %v785
        %v1413 = vsel %vm1396, %v1380, %v787
        %v1414 = vsel %vm1396, %v1381, %v789
        %v1415 = vsel %vm1396, %v1382, %v791
        %v1416 = vsel %vm1396, %v1383, %v793
        %v1417 = vsel %vm1396, %v1384, %v795
        %v1418 = vsel %vm1396, %v1385, %v797
        %v1419 = vsel %vm1396, %v1386, %v799
        %v1420 = vsel %vm1396, %v1387, %v801
        %v1421 = vsel %vm1396, %v1388, %v803
        %v1422 = vsel %vm1396, %v1389, %v805
        %v1423 = vsel %vm1396, %v1390, %v807
        %v1424 = vsel %vm1396, %v1391, %v809
        %v1425 = vsel %vm1396, %v1392, %v811
        %v1426 = vsel %vm1396, %v1393, %v813
        %v1427 = vsel %vm1396, %v1394, %v815
        %v1428 = vsel %vm1396, %v1395, %v817
        %vm1429 = vcmask 130048
        %v1430 = vsel %vm1429, %v1397, %v851
        %v1431 = vsel %vm1429, %v1398, %v853
        %v1432 = vsel %vm1429, %v1399, %v855
        %v1433 = vsel %vm1429, %v1400, %v857
        %v1434 = vsel %vm1429, %v1401, %v859
        %v1435 = vsel %vm1429, %v1402, %v861
        %v1436 = vsel %vm1429, %v1403, %v863
        %v1437 = vsel %vm1429, %v1404, %v865
        %v1438 = vsel %vm1429, %v1405, %v867
        %v1439 = vsel %vm1429, %v1406, %v869
        %v1440 = vsel %vm1429, %v1407, %v871
        %v1441 = vsel %vm1429, %v1408, %v873
        %v1442 = vsel %vm1429, %v1409, %v875
        %v1443 = vsel %vm1429, %v1410, %v877
        %v1444 = vsel %vm1429, %v1411, %v879
        %v1445 = vsel %vm1429, %v1412, %v881
        %v1446 = vsel %vm1429, %v1413, %v883
        %v1447 = vsel %vm1429, %v1414, %v885
        %v1448 = vsel %vm1429, %v1415, %v887
        %v1449 = vsel %vm1429, %v1416, %v889
        %v1450 = vsel %vm1429, %v1417, %v891
        %v1451 = vsel %vm1429, %v1418, %v893
        %v1452 = vsel %vm1429, %v1419, %v895
        %v1453 = vsel %vm1429, %v1420, %v897
        %v1454 = vsel %vm1429, %v1421, %v899
        %v1455 = vsel %vm1429, %v1422, %v901
        %v1456 = vsel %vm1429, %v1423, %v903
        %v1457 = vsel %vm1429, %v1424, %v905
        %v1458 = vsel %vm1429, %v1425, %v907
        %v1459 = vsel %vm1429, %v1426, %v909
        %v1460 = vsel %vm1429, %v1427, %v911
        %v1461 = vsel %vm1429, %v1428, %v913
        %vm1462 = vcmask 162816
        %v1463 = vsel %vm1462, %v1430, %v947
        %v1464 = vsel %vm1462, %v1431, %v949
        %v1465 = vsel %vm1462, %v1432, %v951
        %v1466 = vsel %vm1462, %v1433, %v953
        %v1467 = vsel %vm1462, %v1434, %v955
        %v1468 = vsel %vm1462, %v1435, %v957
        %v1469 = vsel %vm1462, %v1436, %v959
        %v1470 = vsel %vm1462, %v1437, %v961
        %v1471 = vsel %vm1462, %v1438, %v963
        %v1472 = vsel %vm1462, %v1439, %v965
        %v1473 = vsel %vm1462, %v1440, %v967
        %v1474 = vsel %vm1462, %v1441, %v969
        %v1475 = vsel %vm1462, %v1442, %v971
        %v1476 = vsel %vm1462, %v1443, %v973
        %v1477 = vsel %vm1462, %v1444, %v975
        %v1478 = vsel %vm1462, %v1445, %v977
        %v1479 = vsel %vm1462, %v1446, %v979
        %v1480 = vsel %vm1462, %v1447, %v981
        %v1481 = vsel %vm1462, %v1448, %v983
        %v1482 = vsel %vm1462, %v1449, %v985
        %v1483 = vsel %vm1462, %v1450, %v987
        %v1484 = vsel %vm1462, %v1451, %v989
        %v1485 = vsel %vm1462, %v1452, %v991
        %v1486 = vsel %vm1462, %v1453, %v993
        %v1487 = vsel %vm1462, %v1454, %v995
        %v1488 = vsel %vm1462, %v1455, %v997
        %v1489 = vsel %vm1462, %v1456, %v999
        %v1490 = vsel %vm1462, %v1457, %v1001
        %v1491 = vsel %vm1462, %v1458, %v1003
        %v1492 = vsel %vm1462, %v1459, %v1005
        %v1493 = vsel %vm1462, %v1460, %v1007
        %v1494 = vsel %vm1462, %v1461, %v1009
        %vm1495 = vcmask 195584
        %v1496 = vsel %vm1495, %v1463, %v1043
        %v1497 = vsel %vm1495, %v1464, %v1045
        %v1498 = vsel %vm1495, %v1465, %v1047
        %v1499 = vsel %vm1495, %v1466, %v1049
        %v1500 = vsel %vm1495, %v1467, %v1051
        %v1501 = vsel %vm1495, %v1468, %v1053
        %v1502 = vsel %vm1495, %v1469, %v1055
        %v1503 = vsel %vm1495, %v1470, %v1057
        %v1504 = vsel %vm1495, %v1471, %v1059
        %v1505 = vsel %vm1495, %v1472, %v1061
        %v1506 = vsel %vm1495, %v1473, %v1063
        %v1507 = vsel %vm1495, %v1474, %v1065
        %v1508 = vsel %vm1495, %v1475, %v1067
        %v1509 = vsel %vm1495, %v1476, %v1069
        %v1510 = vsel %vm1495, %v1477, %v1071
        %v1511 = vsel %vm1495, %v1478, %v1073
        %v1512 = vsel %vm1495, %v1479, %v1075
        %v1513 = vsel %vm1495, %v1480, %v1077
        %v1514 = vsel %vm1495, %v1481, %v1079
        %v1515 = vsel %vm1495, %v1482, %v1081
        %v1516 = vsel %vm1495, %v1483, %v1083
        %v1517 = vsel %vm1495, %v1484, %v1085
        %v1518 = vsel %vm1495, %v1485, %v1087
        %v1519 = vsel %vm1495, %v1486, %v1089
        %v1520 = vsel %vm1495, %v1487, %v1091
        %v1521 = vsel %vm1495, %v1488, %v1093
        %v1522 = vsel %vm1495, %v1489, %v1095
        %v1523 = vsel %vm1495, %v1490, %v1097
        %v1524 = vsel %vm1495, %v1491, %v1099
        %v1525 = vsel %vm1495, %v1492, %v1101
        %v1526 = vsel %vm1495, %v1493, %v1103
        %v1527 = vsel %vm1495, %v1494, %v1105
        %vm1528 = vcmask 228352
        %v1529 = vsel %vm1528, %v1496, %v1139
        %v1530 = vsel %vm1528, %v1497, %v1141
        %v1531 = vsel %vm1528, %v1498, %v1143
        %v1532 = vsel %vm1528, %v1499, %v1145
        %v1533 = vsel %vm1528, %v1500, %v1147
        %v1534 = vsel %vm1528, %v1501, %v1149
        %v1535 = vsel %vm1528, %v1502, %v1151
        %v1536 = vsel %vm1528, %v1503, %v1153
        %v1537 = vsel %vm1528, %v1504, %v1155
        %v1538 = vsel %vm1528, %v1505, %v1157
        %v1539 = vsel %vm1528, %v1506, %v1159
        %v1540 = vsel %vm1528, %v1507, %v1161
        %v1541 = vsel %vm1528, %v1508, %v1163
        %v1542 = vsel %vm1528, %v1509, %v1165
        %v1543 = vsel %vm1528, %v1510, %v1167
        %v1544 = vsel %vm1528, %v1511, %v1169
        %v1545 = vsel %vm1528, %v1512, %v1171
        %v1546 = vsel %vm1528, %v1513, %v1173
        %v1547 = vsel %vm1528, %v1514, %v1175
        %v1548 = vsel %vm1528, %v1515, %v1177
        %v1549 = vsel %vm1528, %v1516, %v1179
        %v1550 = vsel %vm1528, %v1517, %v1181
        %v1551 = vsel %vm1528, %v1518, %v1183
        %v1552 = vsel %vm1528, %v1519, %v1185
        %v1553 = vsel %vm1528, %v1520, %v1187
        %v1554 = vsel %vm1528, %v1521, %v1189
        %v1555 = vsel %vm1528, %v1522, %v1191
        %v1556 = vsel %vm1528, %v1523, %v1193
        %v1557 = vsel %vm1528, %v1524, %v1195
        %v1558 = vsel %vm1528, %v1525, %v1197
        %v1559 = vsel %vm1528, %v1526, %v1199
        %v1560 = vsel %vm1528, %v1527, %v1201
        %vm1561 = vcmask 261120
        %v1562 = vsel %vm1561, %v1529, %v1235
        %v1563 = vsel %vm1561, %v1530, %v1237
        %v1564 = vsel %vm1561, %v1531, %v1239
        %v1565 = vsel %vm1561, %v1532, %v1241
        %v1566 = vsel %vm1561, %v1533, %v1243
        %v1567 = vsel %vm1561, %v1534, %v1245
        %v1568 = vsel %vm1561, %v1535, %v1247
        %v1569 = vsel %vm1561, %v1536, %v1249
        %v1570 = vsel %vm1561, %v1537, %v1251
        %v1571 = vsel %vm1561, %v1538, %v1253
        %v1572 = vsel %vm1561, %v1539, %v1255
        %v1573 = vsel %vm1561, %v1540, %v1257
        %v1574 = vsel %vm1561, %v1541, %v1259
        %v1575 = vsel %vm1561, %v1542, %v1261
        %v1576 = vsel %vm1561, %v1543, %v1263
        %v1577 = vsel %vm1561, %v1544, %v1265
        %v1578 = vsel %vm1561, %v1545, %v1267
        %v1579 = vsel %vm1561, %v1546, %v1269
        %v1580 = vsel %vm1561, %v1547, %v1271
        %v1581 = vsel %vm1561, %v1548, %v1273
        %v1582 = vsel %vm1561, %v1549, %v1275
        %v1583 = vsel %vm1561, %v1550, %v1277
        %v1584 = vsel %vm1561, %v1551, %v1279
        %v1585 = vsel %vm1561, %v1552, %v1281
        %v1586 = vsel %vm1561, %v1553, %v1283
        %v1587 = vsel %vm1561, %v1554, %v1285
        %v1588 = vsel %vm1561, %v1555, %v1287
        %v1589 = vsel %vm1561, %v1556, %v1289
        %v1590 = vsel %vm1561, %v1557, %v1291
        %v1591 = vsel %vm1561, %v1558, %v1293
        %v1592 = vsel %vm1561, %v1559, %v1295
        %v1593 = vsel %vm1561, %v1560, %v1297
        %v1594 = vpack.c.bf16 %v1563, %v1562
        %v1595 = vpack.c.bf16 %v1565, %v1564
        %v1596 = vpack.c.bf16 %v1567, %v1566
        %v1597 = vpack.c.bf16 %v1569, %v1568
        %v1598 = vpack.c.bf16 %v1571, %v1570
        %v1599 = vpack.c.bf16 %v1573, %v1572
        %v1600 = vpack.c.bf16 %v1575, %v1574
        %v1601 = vpack.c.bf16 %v1577, %v1576
        %v1602 = vpack.c.bf16 %v1579, %v1578
        %v1603 = vpack.c.bf16 %v1581, %v1580
        %v1604 = vpack.c.bf16 %v1583, %v1582
        %v1605 = vpack.c.bf16 %v1585, %v1584
        %v1606 = vpack.c.bf16 %v1587, %v1586
        %v1607 = vpack.c.bf16 %v1589, %v1588
        %v1608 = vpack.c.bf16 %v1591, %v1590
        %v1609 = vpack.c.bf16 %v1593, %v1592
        %v1610 = vld [vmem:[%s212] sm:$0xf]
        %v1611 = vld [vmem:[%s212 + $0x4] sm:$0xf]
        %v1612 = vld [vmem:[%s212 + $0x8] sm:$0xf]
        %v1613 = vld [vmem:[%s212 + $0xc] sm:$0xf]
        %v1614 = vld [vmem:[%s212 + $0x10] sm:$0x3]
        %v1620 = vunpack.c.l.b16 %v1610
        %v1621 = vunpack.c.l.b16 %v1611
        %v1622 = vunpack.c.l.b16 %v1612
        %v1623 = vunpack.c.l.b16 %v1613
        %v1624 = vunpack.c.l.b16 %v1614
        %v1625 = vpack.c.b16 %v1621, %v1620
        %v1626 = vpack.c.b16 %v1623, %v1622
        %v1627 = vpack.c.b16 %v1624, %v1624
        %vm1630 = vcmask 293888
        %v1632 = vsel %vm1630, %v1594, 0
        %v1635 = vsel %vm1630, %v1595, 0
        %v1638 = vsel %vm1630, %v1596, 0
        %v1641 = vsel %vm1630, %v1597, 0
        %v1644 = vsel %vm1630, %v1598, 0
        %v1647 = vsel %vm1630, %v1599, 0
        %v1650 = vsel %vm1630, %v1600, 0
        %v1653 = vsel %vm1630, %v1601, 0
        %v1656 = vsel %vm1630, %v1602, 0
        %v1659 = vsel %vm1630, %v1603, 0
        %v1662 = vsel %vm1630, %v1604, 0
        %v1665 = vsel %vm1630, %v1605, 0
        %v1668 = vsel %vm1630, %v1606, 0
        %v1671 = vsel %vm1630, %v1607, 0
        %v1674 = vsel %vm1630, %v1608, 0
        %v1677 = vsel %vm1630, %v1609, 0
        %vm1679 = vcmask 1041408
        %v1681 = vsel %vm1679, %v1627, 0
        %1683 = vmatprep.subr.bf16.mxu0 0
        %1684 = vmatpush1.bf16.msra.mxu0 %v1625
        %1685 = vmatprep.subr.bf16.mxu0 0
        %1686 = vmatpush1.bf16.msra.mxu0 %v1626
        %1687 = vmatprep.subr.bf16.mxu0 0
        %1688 = vmatpush1.bf16.msra.mxu0 %v1681
        %1689 = vmatprep.subr.bf16.mxu0 0
        %1690 = vmatpush1.bf16.msra.mxu0 0
        %1691 = vmatprep.subr.bf16.mxu0 0
        %1692 = vmatpush1.bf16.msra.mxu0 0
        %1693 = vmatprep.subr.bf16.mxu0 0
        %1694 = vmatpush1.bf16.msra.mxu0 0
        %1695 = vmatprep.subr.bf16.mxu0 0
        %1696 = vmatpush1.bf16.msra.mxu0 0
        %1697 = vmatprep.subr.bf16.mxu0 0
        %1698 = vmatpush1.bf16.msra.mxu0 0
        %1699 = vmatprep.subr.bf16.mxu0 0
        %1700 = vmatpush1.bf16.msra.mxu0 0
        %1701 = vmatprep.subr.bf16.mxu0 0
        %1702 = vmatpush1.bf16.msra.mxu0 0
        %1703 = vmatprep.subr.bf16.mxu0 0
        %1704 = vmatpush1.bf16.msra.mxu0 0
        %1705 = vmatprep.subr.bf16.mxu0 0
        %1706 = vmatpush1.bf16.msra.mxu0 0
        %1707 = vmatprep.subr.bf16.mxu0 0
        %1708 = vmatpush1.bf16.msra.mxu0 0
        %1709 = vmatprep.subr.bf16.mxu0 0
        %1710 = vmatpush1.bf16.msra.mxu0 0
        %1711 = vmatprep.subr.bf16.mxu0 0
        %1712 = vmatpush1.bf16.msra.mxu0 0
        %1713 = vmatprep.subr.bf16.mxu0 0
        %1714 = vmatpush1.bf16.msra.mxu0 0
        %1715 = vmatprep.mubr.bf16.mxu0 0
        %1716 = vmatmul.mubr.bf16.gmra.mrb[0].mxu0 %v1632
        %v1717 = vpop.f32.mrb[0].mxu0
        %v1718 = vadd.f32 0.0, %v1717
        %v1719 = vpop.f32.mrb[0].mxu0
        %v1720 = vpop.f32.mrb[0].mxu0
        %v1721 = vadd.f32 0.0, %v1720
        %v1722 = vpop.f32.mrb[0].mxu0
        %1723 = vmatprep.mubr.bf16.mxu0 0
        %1724 = vmatmul.mubr.bf16.gmra.mrb[0].mxu0 %v1635
        %v1725 = vpop.f32.mrb[0].mxu0
        %v1726 = vadd.f32 0.0, %v1725
        %v1727 = vpop.f32.mrb[0].mxu0
        %v1728 = vpop.f32.mrb[0].mxu0
        %v1729 = vadd.f32 0.0, %v1728
        %v1730 = vpop.f32.mrb[0].mxu0
        %1731 = vmatprep.mubr.bf16.mxu0 0
        %1732 = vmatmul.mubr.bf16.gmra.mrb[0].mxu0 %v1638
        %v1733 = vpop.f32.mrb[0].mxu0
        %v1734 = vadd.f32 0.0, %v1733
        %v1735 = vpop.f32.mrb[0].mxu0
        %v1736 = vpop.f32.mrb[0].mxu0
        %v1737 = vadd.f32 0.0, %v1736
        %v1738 = vpop.f32.mrb[0].mxu0
        %1739 = vmatprep.mubr.bf16.mxu0 0
        %1740 = vmatmul.mubr.bf16.gmra.mrb[0].mxu0 %v1641
        %v1741 = vpop.f32.mrb[0].mxu0
        %v1742 = vadd.f32 0.0, %v1741
        %v1743 = vpop.f32.mrb[0].mxu0
        %v1744 = vpop.f32.mrb[0].mxu0
        %v1745 = vadd.f32 0.0, %v1744
        %v1746 = vpop.f32.mrb[0].mxu0
        %1747 = vmatprep.mubr.bf16.mxu0 0
        %1748 = vmatmul.mubr.bf16.gmra.mrb[0].mxu0 %v1644
        %v1749 = vpop.f32.mrb[0].mxu0
        %v1750 = vadd.f32 0.0, %v1749
        %v1751 = vpop.f32.mrb[0].mxu0
        %v1752 = vpop.f32.mrb[0].mxu0
        %v1753 = vadd.f32 0.0, %v1752
        %v1754 = vpop.f32.mrb[0].mxu0
        %1755 = vmatprep.mubr.bf16.mxu0 0
        %1756 = vmatmul.mubr.bf16.gmra.mrb[0].mxu0 %v1647
        %v1757 = vpop.f32.mrb[0].mxu0
        %v1758 = vadd.f32 0.0, %v1757
        %v1759 = vpop.f32.mrb[0].mxu0
        %v1760 = vpop.f32.mrb[0].mxu0
        %v1761 = vadd.f32 0.0, %v1760
        %v1762 = vpop.f32.mrb[0].mxu0
        %1763 = vmatprep.mubr.bf16.mxu0 0
        %1764 = vmatmul.mubr.bf16.gmra.mrb[0].mxu0 %v1650
        %v1765 = vpop.f32.mrb[0].mxu0
        %v1766 = vadd.f32 0.0, %v1765
        %v1767 = vpop.f32.mrb[0].mxu0
        %v1768 = vpop.f32.mrb[0].mxu0
        %v1769 = vadd.f32 0.0, %v1768
        %v1770 = vpop.f32.mrb[0].mxu0
        %1771 = vmatprep.mubr.bf16.mxu0 0
        %1772 = vmatmul.mubr.bf16.gmra.mrb[0].mxu0 %v1653
        %v1773 = vpop.f32.mrb[0].mxu0
        %v1774 = vadd.f32 0.0, %v1773
        %v1775 = vpop.f32.mrb[0].mxu0
        %v1776 = vpop.f32.mrb[0].mxu0
        %v1777 = vadd.f32 0.0, %v1776
        %v1778 = vpop.f32.mrb[0].mxu0
        %1779 = vmatprep.mubr.bf16.mxu0 0
        %1780 = vmatmul.mubr.bf16.gmra.mrb[0].mxu0 %v1656
        %v1781 = vpop.f32.mrb[0].mxu0
        %v1782 = vadd.f32 0.0, %v1781
        %v1783 = vpop.f32.mrb[0].mxu0
        %v1784 = vpop.f32.mrb[0].mxu0
        %v1785 = vadd.f32 0.0, %v1784
        %v1786 = vpop.f32.mrb[0].mxu0
        %1787 = vmatprep.mubr.bf16.mxu0 0
        %1788 = vmatmul.mubr.bf16.gmra.mrb[0].mxu0 %v1659
        %v1789 = vpop.f32.mrb[0].mxu0
        %v1790 = vadd.f32 0.0, %v1789
        %v1791 = vpop.f32.mrb[0].mxu0
        %v1792 = vpop.f32.mrb[0].mxu0
        %v1793 = vadd.f32 0.0, %v1792
        %v1794 = vpop.f32.mrb[0].mxu0
        %1795 = vmatprep.mubr.bf16.mxu0 0
        %1796 = vmatmul.mubr.bf16.gmra.mrb[0].mxu0 %v1662
        %v1797 = vpop.f32.mrb[0].mxu0
        %v1798 = vadd.f32 0.0, %v1797
        %v1799 = vpop.f32.mrb[0].mxu0
        %v1800 = vpop.f32.mrb[0].mxu0
        %v1801 = vadd.f32 0.0, %v1800
        %v1802 = vpop.f32.mrb[0].mxu0
        %1803 = vmatprep.mubr.bf16.mxu0 0
        %1804 = vmatmul.mubr.bf16.gmra.mrb[0].mxu0 %v1665
        %v1805 = vpop.f32.mrb[0].mxu0
        %v1806 = vadd.f32 0.0, %v1805
        %v1807 = vpop.f32.mrb[0].mxu0
        %v1808 = vpop.f32.mrb[0].mxu0
        %v1809 = vadd.f32 0.0, %v1808
        %v1810 = vpop.f32.mrb[0].mxu0
        %1811 = vmatprep.mubr.bf16.mxu0 0
        %1812 = vmatmul.mubr.bf16.gmra.mrb[0].mxu0 %v1668
        %v1813 = vpop.f32.mrb[0].mxu0
        %v1814 = vadd.f32 0.0, %v1813
        %v1815 = vpop.f32.mrb[0].mxu0
        %v1816 = vpop.f32.mrb[0].mxu0
        %v1817 = vadd.f32 0.0, %v1816
        %v1818 = vpop.f32.mrb[0].mxu0
        %1819 = vmatprep.mubr.bf16.mxu0 0
        %1820 = vmatmul.mubr.bf16.gmra.mrb[0].mxu0 %v1671
        %v1821 = vpop.f32.mrb[0].mxu0
        %v1822 = vadd.f32 0.0, %v1821
        %v1823 = vpop.f32.mrb[0].mxu0
        %v1824 = vpop.f32.mrb[0].mxu0
        %v1825 = vadd.f32 0.0, %v1824
        %v1826 = vpop.f32.mrb[0].mxu0
        %1827 = vmatprep.mubr.bf16.mxu0 0
        %1828 = vmatmul.mubr.bf16.gmra.mrb[0].mxu0 %v1674
        %v1829 = vpop.f32.mrb[0].mxu0
        %v1830 = vadd.f32 0.0, %v1829
        %v1831 = vpop.f32.mrb[0].mxu0
        %v1832 = vpop.f32.mrb[0].mxu0
        %v1833 = vadd.f32 0.0, %v1832
        %v1834 = vpop.f32.mrb[0].mxu0
        %1835 = vmatprep.mubr.bf16.mxu0 0
        %1836 = vmatmul.mubr.bf16.gmra.mrb[0].mxu0 %v1677
        %v1837 = vpop.f32.mrb[0].mxu0
        %v1838 = vadd.f32 0.0, %v1837
        %v1839 = vpop.f32.mrb[0].mxu0
        %v1840 = vpop.f32.mrb[0].mxu0
        %v1841 = vadd.f32 0.0, %v1840
        %v1842 = vpop.f32.mrb[0].mxu0
        %1843 = vdwg.mxu0
        %v1844 = vld [vmem:[%s216] sm:$0x7]
        %v1845 = vlaneseq
        %v1846 = vshrl.u32 %v1845, 7
        %v1847 = vsub.s32 0, %v1846
        %v1848 = vrot.slane %v1844, %v1847
        %v1849 = vmul.f32 %v1718, %v1848
        %v1850 = vmul.f32 %v1721, %v1848
        %v1851 = vmul.f32 %v1726, %v1848
        %v1852 = vmul.f32 %v1729, %v1848
        %v1853 = vmul.f32 %v1734, %v1848
        %v1854 = vmul.f32 %v1737, %v1848
        %v1855 = vmul.f32 %v1742, %v1848
        %v1856 = vmul.f32 %v1745, %v1848
        %v1857 = vmul.f32 %v1750, %v1848
        %v1858 = vmul.f32 %v1753, %v1848
        %v1859 = vmul.f32 %v1758, %v1848
        %v1860 = vmul.f32 %v1761, %v1848
        %v1861 = vmul.f32 %v1766, %v1848
        %v1862 = vmul.f32 %v1769, %v1848
        %v1863 = vmul.f32 %v1774, %v1848
        %v1864 = vmul.f32 %v1777, %v1848
        %v1865 = vmul.f32 %v1782, %v1848
        %v1866 = vmul.f32 %v1785, %v1848
        %v1867 = vmul.f32 %v1790, %v1848
        %v1868 = vmul.f32 %v1793, %v1848
        %v1869 = vmul.f32 %v1798, %v1848
        %v1870 = vmul.f32 %v1801, %v1848
        %v1871 = vmul.f32 %v1806, %v1848
        %v1872 = vmul.f32 %v1809, %v1848
        %v1873 = vmul.f32 %v1814, %v1848
        %v1874 = vmul.f32 %v1817, %v1848
        %v1875 = vmul.f32 %v1822, %v1848
        %v1876 = vmul.f32 %v1825, %v1848
        %v1877 = vmul.f32 %v1830, %v1848
        %v1878 = vmul.f32 %v1833, %v1848
        %v1879 = vmul.f32 %v1838, %v1848
        %v1880 = vmul.f32 %v1841, %v1848
        %v1881 = vlaneseq
        %v1882 = vshrl.u32 %v1881, 7
        %v1883 = vsub.s32 1, %v1882
        %v1884 = vrot.slane %v1844, %v1883
        %v1885 = vadd.f32 %v1849, %v1884
        %v1886 = vadd.f32 %v1850, %v1884
        %v1887 = vadd.f32 %v1851, %v1884
        %v1888 = vadd.f32 %v1852, %v1884
        %v1889 = vadd.f32 %v1853, %v1884
        %v1890 = vadd.f32 %v1854, %v1884
        %v1891 = vadd.f32 %v1855, %v1884
        %v1892 = vadd.f32 %v1856, %v1884
        %v1893 = vadd.f32 %v1857, %v1884
        %v1894 = vadd.f32 %v1858, %v1884
        %v1895 = vadd.f32 %v1859, %v1884
        %v1896 = vadd.f32 %v1860, %v1884
        %v1897 = vadd.f32 %v1861, %v1884
        %v1898 = vadd.f32 %v1862, %v1884
        %v1899 = vadd.f32 %v1863, %v1884
        %v1900 = vadd.f32 %v1864, %v1884
        %v1901 = vadd.f32 %v1865, %v1884
        %v1902 = vadd.f32 %v1866, %v1884
        %v1903 = vadd.f32 %v1867, %v1884
        %v1904 = vadd.f32 %v1868, %v1884
        %v1905 = vadd.f32 %v1869, %v1884
        %v1906 = vadd.f32 %v1870, %v1884
        %v1907 = vadd.f32 %v1871, %v1884
        %v1908 = vadd.f32 %v1872, %v1884
        %v1909 = vadd.f32 %v1873, %v1884
        %v1910 = vadd.f32 %v1874, %v1884
        %v1911 = vadd.f32 %v1875, %v1884
        %v1912 = vadd.f32 %v1876, %v1884
        %v1913 = vadd.f32 %v1877, %v1884
        %v1914 = vadd.f32 %v1878, %v1884
        %v1915 = vadd.f32 %v1879, %v1884
        %v1916 = vadd.f32 %v1880, %v1884
        %vm1917 = vcmp.ge.f32.partialorder %v1885, 0.0
        %vm1918 = vcmp.ge.f32.partialorder %v1886, 0.0
        %vm1919 = vcmp.ge.f32.partialorder %v1887, 0.0
        %vm1920 = vcmp.ge.f32.partialorder %v1888, 0.0
        %vm1921 = vcmp.ge.f32.partialorder %v1889, 0.0
        %vm1922 = vcmp.ge.f32.partialorder %v1890, 0.0
        %vm1923 = vcmp.ge.f32.partialorder %v1891, 0.0
        %vm1924 = vcmp.ge.f32.partialorder %v1892, 0.0
        %vm1925 = vcmp.ge.f32.partialorder %v1893, 0.0
        %vm1926 = vcmp.ge.f32.partialorder %v1894, 0.0
        %vm1927 = vcmp.ge.f32.partialorder %v1895, 0.0
        %vm1928 = vcmp.ge.f32.partialorder %v1896, 0.0
        %vm1929 = vcmp.ge.f32.partialorder %v1897, 0.0
        %vm1930 = vcmp.ge.f32.partialorder %v1898, 0.0
        %vm1931 = vcmp.ge.f32.partialorder %v1899, 0.0
        %vm1932 = vcmp.ge.f32.partialorder %v1900, 0.0
        %vm1933 = vcmp.ge.f32.partialorder %v1901, 0.0
        %vm1934 = vcmp.ge.f32.partialorder %v1902, 0.0
        %vm1935 = vcmp.ge.f32.partialorder %v1903, 0.0
        %vm1936 = vcmp.ge.f32.partialorder %v1904, 0.0
        %vm1937 = vcmp.ge.f32.partialorder %v1905, 0.0
        %vm1938 = vcmp.ge.f32.partialorder %v1906, 0.0
        %vm1939 = vcmp.ge.f32.partialorder %v1907, 0.0
        %vm1940 = vcmp.ge.f32.partialorder %v1908, 0.0
        %vm1941 = vcmp.ge.f32.partialorder %v1909, 0.0
        %vm1942 = vcmp.ge.f32.partialorder %v1910, 0.0
        %vm1943 = vcmp.ge.f32.partialorder %v1911, 0.0
        %vm1944 = vcmp.ge.f32.partialorder %v1912, 0.0
        %vm1945 = vcmp.ge.f32.partialorder %v1913, 0.0
        %vm1946 = vcmp.ge.f32.partialorder %v1914, 0.0
        %vm1947 = vcmp.ge.f32.partialorder %v1915, 0.0
        %vm1948 = vcmp.ge.f32.partialorder %v1916, 0.0
        %v1949 = vlaneseq
        %v1950 = vshrl.u32 %v1949, 7
        %v1951 = vsub.s32 2, %v1950
        %v1952 = vrot.slane %v1844, %v1951
        %v1953 = vmul.f32 %v1952, %v1885
        %v1954 = vmul.f32 %v1952, %v1886
        %v1955 = vmul.f32 %v1952, %v1887
        %v1956 = vmul.f32 %v1952, %v1888
        %v1957 = vmul.f32 %v1952, %v1889
        %v1958 = vmul.f32 %v1952, %v1890
        %v1959 = vmul.f32 %v1952, %v1891
        %v1960 = vmul.f32 %v1952, %v1892
        %v1961 = vmul.f32 %v1952, %v1893
        %v1962 = vmul.f32 %v1952, %v1894
        %v1963 = vmul.f32 %v1952, %v1895
        %v1964 = vmul.f32 %v1952, %v1896
        %v1965 = vmul.f32 %v1952, %v1897
        %v1966 = vmul.f32 %v1952, %v1898
        %v1967 = vmul.f32 %v1952, %v1899
        %v1968 = vmul.f32 %v1952, %v1900
        %v1969 = vmul.f32 %v1952, %v1901
        %v1970 = vmul.f32 %v1952, %v1902
        %v1971 = vmul.f32 %v1952, %v1903
        %v1972 = vmul.f32 %v1952, %v1904
        %v1973 = vmul.f32 %v1952, %v1905
        %v1974 = vmul.f32 %v1952, %v1906
        %v1975 = vmul.f32 %v1952, %v1907
        %v1976 = vmul.f32 %v1952, %v1908
        %v1977 = vmul.f32 %v1952, %v1909
        %v1978 = vmul.f32 %v1952, %v1910
        %v1979 = vmul.f32 %v1952, %v1911
        %v1980 = vmul.f32 %v1952, %v1912
        %v1981 = vmul.f32 %v1952, %v1913
        %v1982 = vmul.f32 %v1952, %v1914
        %v1983 = vmul.f32 %v1952, %v1915
        %v1984 = vmul.f32 %v1952, %v1916
        %v1985 = vsel %vm1917, %v1885, %v1953
        %v1986 = vsel %vm1918, %v1886, %v1954
        %v1987 = vsel %vm1919, %v1887, %v1955
        %v1988 = vsel %vm1920, %v1888, %v1956
        %v1989 = vsel %vm1921, %v1889, %v1957
        %v1990 = vsel %vm1922, %v1890, %v1958
        %v1991 = vsel %vm1923, %v1891, %v1959
        %v1992 = vsel %vm1924, %v1892, %v1960
        %v1993 = vsel %vm1925, %v1893, %v1961
        %v1994 = vsel %vm1926, %v1894, %v1962
        %v1995 = vsel %vm1927, %v1895, %v1963
        %v1996 = vsel %vm1928, %v1896, %v1964
        %v1997 = vsel %vm1929, %v1897, %v1965
        %v1998 = vsel %vm1930, %v1898, %v1966
        %v1999 = vsel %vm1931, %v1899, %v1967
        %v2000 = vsel %vm1932, %v1900, %v1968
        %v2001 = vsel %vm1933, %v1901, %v1969
        %v2002 = vsel %vm1934, %v1902, %v1970
        %v2003 = vsel %vm1935, %v1903, %v1971
        %v2004 = vsel %vm1936, %v1904, %v1972
        %v2005 = vsel %vm1937, %v1905, %v1973
        %v2006 = vsel %vm1938, %v1906, %v1974
        %v2007 = vsel %vm1939, %v1907, %v1975
        %v2008 = vsel %vm1940, %v1908, %v1976
        %v2009 = vsel %vm1941, %v1909, %v1977
        %v2010 = vsel %vm1942, %v1910, %v1978
        %v2011 = vsel %vm1943, %v1911, %v1979
        %v2012 = vsel %vm1944, %v1912, %v1980
        %v2013 = vsel %vm1945, %v1913, %v1981
        %v2014 = vsel %vm1946, %v1914, %v1982
        %v2015 = vsel %vm1947, %v1915, %v1983
        %v2016 = vsel %vm1948, %v1916, %v1984
        %2017 = vst [vmem:[%s203] sm:$0xff] %v1985
        %2018 = vst [vmem:[%s203 + $0x8] sm:$0xff] %v1986
        %2019 = vst [vmem:[%s203 + $0x10] sm:$0xff] %v1987
        %2020 = vst [vmem:[%s203 + $0x18] sm:$0xff] %v1988
        %2021 = vst [vmem:[%s203 + $0x20] sm:$0xff] %v1989
        %2022 = vst [vmem:[%s203 + $0x28] sm:$0xff] %v1990
        %2023 = vst [vmem:[%s203 + $0x30] sm:$0xff] %v1991
        %2024 = vst [vmem:[%s203 + $0x38] sm:$0xff] %v1992
        %2025 = vst [vmem:[%s203 + $0x40] sm:$0xff] %v1993
        %2026 = vst [vmem:[%s203 + $0x48] sm:$0xff] %v1994
        %2027 = vst [vmem:[%s203 + $0x50] sm:$0xff] %v1995
        %2028 = vst [vmem:[%s203 + $0x58] sm:$0xff] %v1996
        %2029 = vst [vmem:[%s203 + $0x60] sm:$0xff] %v1997
        %2030 = vst [vmem:[%s203 + $0x68] sm:$0xff] %v1998
        %2031 = vst [vmem:[%s203 + $0x70] sm:$0xff] %v1999
        %2032 = vst [vmem:[%s203 + $0x78] sm:$0xff] %v2000
        %2033 = vst [vmem:[%s203 + $0x80] sm:$0xff] %v2001
        %2034 = vst [vmem:[%s203 + $0x88] sm:$0xff] %v2002
        %2035 = vst [vmem:[%s203 + $0x90] sm:$0xff] %v2003
        %2036 = vst [vmem:[%s203 + $0x98] sm:$0xff] %v2004
        %2037 = vst [vmem:[%s203 + $0xa0] sm:$0xff] %v2005
        %2038 = vst [vmem:[%s203 + $0xa8] sm:$0xff] %v2006
        %2039 = vst [vmem:[%s203 + $0xb0] sm:$0xff] %v2007
        %2040 = vst [vmem:[%s203 + $0xb8] sm:$0xff] %v2008
        %2041 = vst [vmem:[%s203 + $0xc0] sm:$0xff] %v2009
        %2042 = vst [vmem:[%s203 + $0xc8] sm:$0xff] %v2010
        %2043 = vst [vmem:[%s203 + $0xd0] sm:$0xff] %v2011
        %2044 = vst [vmem:[%s203 + $0xd8] sm:$0xff] %v2012
        %2045 = vst [vmem:[%s203 + $0xe0] sm:$0xff] %v2013
        %2046 = vst [vmem:[%s203 + $0xe8] sm:$0xff] %v2014
        %2047 = vst [vmem:[%s203 + $0xf0] sm:$0xff] %v2015
        %2048 = vst [vmem:[%s203 + $0xf8] sm:$0xff] %v2016
        %s2049 = sand.u32 %s117, 1
        %s2050 = scalar_lea.sflag [#allocation3], %s2049
        %s2051 = sand.u32 %s117, 1
        %s2052 = smul.addr %s2051, 256
        %s2053 = scalar_lea.vmem [#allocation2], %s2052
        // Predicated region
        $region33: #{tpu_custom_call.1} parent=31 // pred_check
          %p2054 = pneg %p127
        $region34: #{tpu_custom_call.1} parent=31 // pred_check_branch
          %2056 = sbr.rel (%p2054) target = $region36
        $region35: #{tpu_custom_call.1} parent=31 // pred_region
          %s2058 = ssub.s32 4096, 4096
          %2059 = vsyncadd %s2050, %s2058
          %s2060 = smul.addr %s21, 32
          %s2061 = sadd.s32 %s22, %s2060
          %s2062 = smul.addr %s2061, 128
          %s2063 = scalar_lea.hbm %s3, %s2062
          %s2064 = sshll.u32 %s2053, 4
          %s2065 = int_to_ptr.vmem [resolvable:$true] %s2064
          %2070 = dma.vmem_to_hbm [thread:$0]  %s2065, 4096, %s2063, %s2050, 128, 128, 8
        $region36: #{tpu_custom_call.1} parent=31 // pred_fallthru
          _
      $region32: #{tpu_custom_call.1} parent=5 // pred_fallthru
        _
      %p2071 = scmp.le.s32.totalorder 2, %s12
      // Predicated region
      $region37: #{tpu_custom_call.1} parent=5 // pred_check
        %p2072 = pneg %p2071
      $region38: #{tpu_custom_call.1} parent=5 // pred_check_branch
        %2074 = sbr.rel (%p2072) target = $region40
      $region39: #{tpu_custom_call.1} parent=5 // pred_region
        %s2075 = ssub.s32 %s12, 2
        // Predicated region
        $region41: #{tpu_custom_call.1} parent=39 // pred_check
          %p2076 = pneg %p133
        $region42: #{tpu_custom_call.1} parent=39 // pred_check_branch
          %2078 = sbr.rel (%p2076) target = $region44
        $region43: #{tpu_custom_call.1} parent=39 // pred_region
          %s2079 = sand.u32 %s118, 1
          %s2080 = scalar_lea.sflag [#allocation3], %s2079
          %s2081 = sand.u32 %s118, 1
          %s2082 = smul.addr %s2081, 256
          %s2083 = scalar_lea.vmem [#allocation2], %s2082
          %2084 = dma.done %s2080, 4096
        $region44: #{tpu_custom_call.1} parent=39 // pred_fallthru
          _
      $region40: #{tpu_custom_call.1} parent=5 // pred_fallthru
        _
    $region6: #{tpu_custom_call.1} parent=1 // loop_footer
      %s16 = sadd.s32 1, %s12
    $region7: #{tpu_custom_call.1} parent=1 // loop_footer_branch
      %11 = sbr.rel target = $region3
    $region8: #{tpu_custom_call.1} parent=1 // loop_exit
      _
    %2085 = vsyncpa [#allocation3], 1
    %s2086 = scalar_lea.sflag [#allocation3], 1
    %2087 = vsyncpa %s2086, 1

</llo_original>
